<compile_context>
chip_gen: v7x
topology: tpu7x:2x2x1
jax: 0.10.0
libtpu: 0.0.40
codegen_flags: <defaults>
</compile_context>

<pallas_src>
import functools

import jax
import jax.numpy as jnp
from jax import lax
from jax.experimental import pallas as pl
from jax.experimental.pallas import tpu as pltpu


# ---------------------------------------------------------------------------
# Kernel 1: conv1 as a transposed GEMM  (out_c, K1) @ (K1, cols) + bias, ReLU.
#   bf16 MXU operands (pre-cast outside), fp32 accumulate + epilogue, bf16 out.
#   Grid tiles the lane-dense cols axis; weights stay resident across steps.
# ---------------------------------------------------------------------------
def _conv1_kernel(w_ref, b_ref, p_ref, o_ref):
    y = jnp.dot(w_ref[...], p_ref[...], preferred_element_type=jnp.float32)
    y = y + b_ref[...]
    o_ref[...] = jnp.maximum(y, 0.0).astype(o_ref.dtype)


def conv1_pallas(w1m, b1col, patches_t, *, col_tile=2048):
    out_c, k1 = w1m.shape              # (32, c_in*8*8)
    _, cols = patches_t.shape          # (K1, n*oh1*ow1)
    tc = cols if cols <= col_tile else col_tile
    grid = (pl.cdiv(cols, tc),)
    return pl.pallas_call(
        _conv1_kernel,
        out_shape=jax.ShapeDtypeStruct((out_c, cols), jnp.bfloat16),
        grid=grid,
        in_specs=[
            pl.BlockSpec((out_c, k1), lambda i: (0, 0)),   # resident weights
            pl.BlockSpec((out_c, 1), lambda i: (0, 0)),    # resident bias column
            pl.BlockSpec((k1, tc), lambda i: (0, i)),      # streamed patch tile
        ],
        out_specs=pl.BlockSpec((out_c, tc), lambda i: (0, i)),
        compiler_params=pltpu.CompilerParams(
            dimension_semantics=("parallel",),
            vmem_limit_bytes=32 * 1024 * 1024),
    )(w1m, b1col, patches_t)


# ---------------------------------------------------------------------------
# Kernel 2: batch-tiled fused conv2 + conv3 (tap GEMMs) + shared FC + heads.
#   One grid step per TB-sample tile; everything stays in VMEM.
# ---------------------------------------------------------------------------
def _tail_kernel(p2_ref, w2_ref, b2_ref, w3_ref, b3_ref, wf_ref, bf_ref,
                 wh_ref, bh_ref, o_ref, a3s_ref, *,
                 tb, conv2_out_hw, conv3_khw, conv3_out_hw, action_dims, hpad):
    oh2, ow2 = conv2_out_hw
    kh3, kw3 = conv3_khw
    oh3, ow3 = conv3_out_hw
    r2 = oh2 * ow2
    pad3 = (kh3 - 1) * ow2 + (kw3 - 1)
    m3 = tb * r2 - pad3                         # rows covering every valid conv3 output

    # ---- conv2: one batched GEMM, M = tb*r2 ---------------------------------
    a2 = jnp.dot(p2_ref[...], w2_ref[...], preferred_element_type=jnp.float32)
    a2 = jnp.maximum(a2 + b2_ref[...], 0.0).astype(jnp.bfloat16)     # (tb*r2, 64)

    # ---- conv3: 9 tap-accumulated GEMMs on shifted static slices ------------
    # valid output row (t, oy3, ox3) lives at flat row t*r2 + oy3*ow2 + ox3;
    # its tap source is that row shifted by d = ki*ow2 + kj (stays in-sample).
    acc3 = jnp.zeros((m3, w3_ref.shape[-1]), jnp.float32)
    for ki in range(kh3):
        for kj in range(kw3):
            d = ki * ow2 + kj
            acc3 = acc3 + jnp.dot(a2[d:d + m3, :], w3_ref[ki * kw3 + kj],
                                  preferred_element_type=jnp.float32)
    a3 = jnp.maximum(acc3 + b3_ref[...], 0.0).astype(jnp.bfloat16)   # (m3, 64)

    # ---- scatter rows per sample into a (tb, r2, 64) scratch (static slices) -
    for t in range(tb):
        lo = t * r2
        hi = min(lo + r2, m3)
        a3s_ref[t, :hi - lo, :] = a3[lo:hi, :]

    # ---- shared FC: one (tb,64)@(64,512) GEMM per valid conv3 position -------
    accf = jnp.zeros((tb, wf_ref.shape[-1]), jnp.float32)
    for oy in range(oh3):
        for ox in range(ow3):
            pos = oy * ow2 + ox
            accf = accf + jnp.dot(a3s_ref[:, pos, :], wf_ref[oy * ow3 + ox],
                                  preferred_element_type=jnp.float32)
    shared = jnp.maximum(accf + bf_ref[...], 0.0).astype(jnp.bfloat16)  # (tb, 512)

    # ---- merged heads + masked per-head softmax (exact normalization) --------
    logits = jnp.dot(shared, wh_ref[...], preferred_element_type=jnp.float32)
    logits = logits + bh_ref[...]                                    # (tb, hpad)
    col = lax.broadcasted_iota(jnp.int32, (tb, hpad), 1)
    probs = jnp.zeros((tb, hpad), jnp.float32)
    hoff = 0
    for dim in action_dims:
        mask = (col >= hoff) & (col < hoff + dim)
        z = jnp.where(mask, logits, -jnp.inf)
        zmax = jnp.max(z, axis=-1, keepdims=True)
        e = jnp.where(mask, jnp.exp(z - zmax), 0.0)
        s = jnp.sum(e, axis=-1, keepdims=True)
        probs = probs + e / s
        hoff += dim
    o_ref[...] = probs


def _full_spec(shape):
    nd = len(shape)
    return pl.BlockSpec(shape, lambda i, nd=nd: (0,) * nd)


def tail_pallas(p2_flat, w2, b2, w3, b3, wf, bf, wh, bh, *, n, tb,
                conv2_out_hw, conv3_khw, conv3_out_hw, action_dims, hpad):
    r2 = conv2_out_hw[0] * conv2_out_hw[1]
    k2 = p2_flat.shape[1]
    kernel = functools.partial(
        _tail_kernel, tb=tb, conv2_out_hw=conv2_out_hw, conv3_khw=conv3_khw,
        conv3_out_hw=conv3_out_hw, action_dims=action_dims, hpad=hpad)
    return pl.pallas_call(
        kernel,
        out_shape=jax.ShapeDtypeStruct((n, hpad), jnp.float32),
        grid=(n // tb,),
        in_specs=[
            pl.BlockSpec((tb * r2, k2), lambda i: (i, 0)),   # batch-tiled conv2 patches
            _full_spec(w2.shape), _full_spec(b2.shape),
            _full_spec(w3.shape), _full_spec(b3.shape),
            _full_spec(wf.shape), _full_spec(bf.shape),
            _full_spec(wh.shape), _full_spec(bh.shape),
        ],
        out_specs=pl.BlockSpec((tb, hpad), lambda i: (i, 0)),
        scratch_shapes=[pltpu.VMEM((tb, r2, w3.shape[-1]), jnp.bfloat16)],
        compiler_params=pltpu.CompilerParams(
            dimension_semantics=("parallel",),
            vmem_limit_bytes=48 * 1024 * 1024),
    )(p2_flat, w2, b2, w3, b3, wf, bf, wh, bh)


# ---------------------------------------------------------------------------
# im2col / patch-gather glue (plain JAX, fused by XLA under the enclosing jit).
# ---------------------------------------------------------------------------
def _im2col_nchw_T(x, kh, kw, stride):
    """NCHW input -> transposed patch matrix (c*kh*kw, n*oh*ow); K order (c,kh,kw)."""
    n, c, h, w = x.shape
    oh = (h - kh) // stride + 1
    ow = (w - kw) // stride + 1
    taps = []
    for ki in range(kh):
        for kj in range(kw):
            taps.append(x[:, :, ki:ki + stride * oh:stride, kj:kj + stride * ow:stride])
    p = jnp.stack(taps, axis=0).reshape(kh, kw, n, c, oh, ow)
    p = p.transpose(3, 0, 1, 2, 4, 5)                     # (c, kh, kw, n, oh, ow)
    return p.reshape(c * kh * kw, n * oh * ow), oh, ow


def _conv2_patches_from_a1t(a1t, n, oh1, ow1, kh, kw, stride):
    """Channel-major conv1 output (32, n*oh1*ow1) -> flat conv2 patches
    (n*oh2*ow2, kh*kw*32) with K order (kh, kw, c); single fused gather, no NHWC pass."""
    c = a1t.shape[0]
    oh2 = (oh1 - kh) // stride + 1
    ow2 = (ow1 - kw) // stride + 1
    x = a1t.reshape(c, n, oh1, ow1)
    taps = []
    for ki in range(kh):
        for kj in range(kw):
            taps.append(x[:, :, ki:ki + stride * oh2:stride, kj:kj + stride * ow2:stride])
    p = jnp.stack(taps, axis=0).reshape(kh, kw, c, n, oh2, ow2)
    p = p.transpose(3, 4, 5, 0, 1, 2)                     # (n, oh2, ow2, kh, kw, c)
    return p.reshape(n * oh2 * ow2, kh * kw * c), oh2, ow2


# ---------------------------------------------------------------------------
# Parameters: torch-layout init + one-time kernel-layout preparation (bf16).
# ---------------------------------------------------------------------------
def _uniform(key, shape, fan_in):
    bound = 1.0 / jnp.sqrt(jnp.float32(fan_in))
    return jax.random.uniform(key, shape, jnp.float32, -bound, bound)


def _conv_geometry(h, w):
    o1h, o1w = (h - 8) // 4 + 1, (w - 8) // 4 + 1
    o2h, o2w = (o1h - 4) // 2 + 1, (o1w - 4) // 2 + 1
    o3h, o3w = (o2h - 3) // 1 + 1, (o2w - 3) // 1 + 1
    return o1h, o1w, o2h, o2w, o3h, o3w


def init_actor_params(key, input_dims, action_dims):
    """Parameters in the torch layouts (uniform(-1/sqrt(fan_in), +) init)."""
    c_in, h, w = input_dims
    keys = jax.random.split(key, 8 + 2 * len(action_dims))
    p = {}
    p["c1_w"] = _uniform(keys[0], (32, c_in, 8, 8), c_in * 8 * 8)
    p["c1_b"] = _uniform(keys[1], (32,), c_in * 8 * 8)
    p["c2_w"] = _uniform(keys[2], (64, 32, 4, 4), 32 * 4 * 4)
    p["c2_b"] = _uniform(keys[3], (64,), 32 * 4 * 4)
    p["c3_w"] = _uniform(keys[4], (64, 64, 3, 3), 64 * 3 * 3)
    p["c3_b"] = _uniform(keys[5], (64,), 64 * 3 * 3)
    _, _, _, _, o3h, o3w = _conv_geometry(h, w)
    fc_in = 64 * o3h * o3w
    p["fc_w"] = _uniform(keys[6], (512, fc_in), fc_in)     # torch (out, in)
    p["fc_b"] = _uniform(keys[7], (512,), fc_in)
    p["heads"] = [(_uniform(keys[8 + 2 * i], (dim, 512), 512),
                   _uniform(keys[9 + 2 * i], (dim,), 512))
                  for i, dim in enumerate(action_dims)]
    return p


def prepare_params(p, input_dims, action_dims, hpad=128):
    """One-time weight layout prep: reshape / permute / concat / lane-pad / bf16-cast."""
    _, h, w = input_dims
    _, _, _, _, o3h, o3w = _conv_geometry(h, w)
    q = {}
    # conv1: transposed-GEMM lhs (out_c, c*kh*kw) bf16, bias as an fp32 column
    q["c1_wm"] = p["c1_w"].reshape(32, -1).astype(jnp.bfloat16)
    q["c1_bc"] = p["c1_b"].reshape(32, 1)
    # conv2: rhs (kh*kw*c_in, out_c) bf16 (K order kh,kw,c), fp32 bias row
    q["c2_wm"] = p["c2_w"].transpose(2, 3, 1, 0).reshape(4 * 4 * 32, 64).astype(jnp.bfloat16)
    q["c2_br"] = p["c2_b"].reshape(1, 64)
    # conv3: per-tap (kh*kw, c_in, c_out) bf16 blocks for tap-accumulated GEMMs
    q["c3_wt"] = p["c3_w"].transpose(2, 3, 1, 0).reshape(3 * 3, 64, 64).astype(jnp.bfloat16)
    q["c3_br"] = p["c3_b"].reshape(1, 64)
    # fc: per-conv3-position (o3h*o3w, 64, 512) bf16 blocks (torch flatten is (c,oy,ox))
    q["fc_wt"] = (p["fc_w"].reshape(512, 64, o3h, o3w)
                  .transpose(2, 3, 1, 0).reshape(o3h * o3w, 64, 512).astype(jnp.bfloat16))
    q["fc_br"] = p["fc_b"].reshape(1, 512)
    # heads: merge along the output dim and zero-pad lanes to a multiple of 128
    total = sum(action_dims)
    hpad = max(hpad, ((total + 127) // 128) * 128)
    wh = jnp.concatenate([hw.T for hw, _ in p["heads"]], axis=1)     # (512, total)
    bh = jnp.concatenate([hb for _, hb in p["heads"]], axis=0)       # (total,)
    q["head_w"] = jnp.pad(wh, ((0, 0), (0, hpad - total))).astype(jnp.bfloat16)
    q["head_b"] = jnp.pad(bh, (0, hpad - total)).reshape(1, hpad)
    return q


def _pick_tb(n, max_tb=64):
    """Batch tile for kernel 2: prefer a multiple-of-8 divisor of n (aligned blocks),
    else run the whole batch as one block (block == full dims is always legal)."""
    for tb in range(min(n, max_tb), 0, -1):
        if n % tb == 0 and tb % 8 == 0:
            return tb
    return n


# ---------------------------------------------------------------------------
# Forward pass (mirrors ActorNetwork.forward), fully under one jit.
# ---------------------------------------------------------------------------
@functools.partial(jax.jit, static_argnames=("action_dims",))
def actor_forward(params, state, *, action_dims):
    n = state.shape[0]
    # conv1 patches (XLA glue), pre-cast bf16 -> Pallas kernel 1 (transposed GEMM)
    p1t, oh1, ow1 = _im2col_nchw_T(state, 8, 8, 4)
    a1t = conv1_pallas(params["c1_wm"], params["c1_bc"], p1t.astype(jnp.bfloat16))
    # conv2 patches gathered directly from channel-major bf16 conv1 output
    p2, oh2, ow2 = _conv2_patches_from_a1t(a1t, n, oh1, ow1, 4, 4, 2)
    oh3, ow3 = oh2 - 2, ow2 - 2
    hpad = params["head_w"].shape[1]
    tb = _pick_tb(n)
    padded = tail_pallas(
        p2, params["c2_wm"], params["c2_br"], params["c3_wt"], params["c3_br"],
        params["fc_wt"], params["fc_br"], params["head_w"], params["head_b"],
        n=n, tb=tb, conv2_out_hw=(oh2, ow2), conv3_khw=(3, 3),
        conv3_out_hw=(oh3, ow3), action_dims=action_dims, hpad=hpad)   # (n, hpad)
    outs, off = [], 0
    for dim in action_dims:
        outs.append(padded[:, off:off + dim])
        off += dim
    return tuple(outs)


# ---------------------------------------------------------------------------
# Pure-JAX fp32 reference of the torch module (for the correctness check).
# ---------------------------------------------------------------------------
def actor_reference(p, state):
    def conv(x, wt, b, stride):
        y = lax.conv_general_dilated(x, wt, (stride, stride), "VALID",
                                     dimension_numbers=("NCHW", "OIHW", "NCHW"))
        return jax.nn.relu(y + b.reshape(1, -1, 1, 1))
    x = conv(state, p["c1_w"], p["c1_b"], 4)
    x = conv(x, p["c2_w"], p["c2_b"], 2)
    x = conv(x, p["c3_w"], p["c3_b"], 1)
    flat = x.reshape(x.shape[0], -1)
    shared = jax.nn.relu(flat @ p["fc_w"].T + p["fc_b"])
    return tuple(jax.nn.softmax(shared @ hw.T + hb, axis=-1) for hw, hb in p["heads"])


if __name__ == "__main__":
    # Small-but-valid shapes: the conv stack (k8/s4, k4/s2, k3/s1) needs H,W >= 36.
    batch = 2
    input_dims = (12, 36, 36)
    action_dims = (4, 3)

    key = jax.random.PRNGKey(0)
    pkey, xkey = jax.random.split(key)
    torch_params = init_actor_params(pkey, input_dims, action_dims)
    params = prepare_params(torch_params, input_dims, action_dims)
    state = jax.random.uniform(xkey, (batch,) + input_dims, jnp.float32)

    probs = actor_forward(params, state, action_dims=action_dims)
    probs = [jax.block_until_ready(x) for x in probs]

    # structural sanity: shapes, non-negativity, rows sum to 1 (exact softmax)
    for x, dim in zip(probs, action_dims):
        assert x.shape == (batch, dim), x.shape
        assert bool(jnp.all(x >= 0.0))
        assert bool(jnp.all(jnp.abs(jnp.sum(x, axis=-1) - 1.0) < 1e-3))

    # numerical check vs. the pure-JAX fp32 reference (bf16 MXU operands -> loose tol)
    ref = actor_reference(torch_params, state)
    for x, r in zip(probs, ref):
        err = float(jnp.max(jnp.abs(x - r)))
        assert err < 3e-2, err

    print("KERNEL_OK")
</pallas_src>

<mosaic_0001>
module attributes {stable_mosaic.version = 11 : i64} {
  func.func @_conv1_kernel(%arg0: i32, %arg1: memref<32x768xbf16, #tpu.memory_space<vmem>>, %arg2: memref<32x1xf32, #tpu.memory_space<vmem>>, %arg3: memref<768x128xbf16, #tpu.memory_space<vmem>>, %arg4: memref<32x128xbf16, #tpu.memory_space<vmem>>) attributes {dimension_semantics = [#tpu.dimension_semantics<parallel>], iteration_bounds = array<i64: 1>, scalar_prefetch = 0 : i64, scratch_operands = 0 : i64, tpu.core_type = #tpu.core_type<tc>, window_params = [{pipeline_mode = #tpu.pipeline_mode<synchronous>, transform_indices = @transform_0, window_bounds = array<i64: 32, 768>}, {pipeline_mode = #tpu.pipeline_mode<synchronous>, transform_indices = @transform_1, window_bounds = array<i64: 32, 1>}, {transform_indices = @transform_2, window_bounds = array<i64: 768, 128>}, {transform_indices = @transform_3, window_bounds = array<i64: 32, 128>}]} {
    %c0 = arith.constant 0 : index
    %c0_0 = arith.constant 0 : index
    %0 = vector.load %arg1[%c0, %c0_0] : memref<32x768xbf16, #tpu.memory_space<vmem>>, vector<32x768xbf16>
    %c0_1 = arith.constant 0 : index
    %c0_2 = arith.constant 0 : index
    %1 = vector.load %arg3[%c0_1, %c0_2] : memref<768x128xbf16, #tpu.memory_space<vmem>>, vector<768x128xbf16>
    %cst = arith.constant dense<0.000000e+00> : vector<32x128xf32>
    %2 = tpu.matmul %0, %1, %cst {dimension_numbers = #tpu.dot_dimension_numbers<[1], [0], [0], [1], [0, 0, 1, 1], [], []>} : vector<32x768xbf16>, vector<768x128xbf16>, vector<32x128xf32> -> vector<32x128xf32>
    %c0_3 = arith.constant 0 : index
    %c0_4 = arith.constant 0 : index
    %3 = vector.load %arg2[%c0_3, %c0_4] : memref<32x1xf32, #tpu.memory_space<vmem>>, vector<32x1xf32>
    %4 = vector.broadcast %3 : vector<32x1xf32> to vector<32x128xf32>
    %5 = arith.addf %2, %4 : vector<32x128xf32>
    %cst_5 = arith.constant 0.000000e+00 : f32
    %6 = vector.broadcast %cst_5 : f32 to vector<32x128xf32>
    %7 = arith.maximumf %5, %6 : vector<32x128xf32>
    %8 = arith.truncf %7 : vector<32x128xf32> to vector<32x128xbf16>
    %c0_6 = arith.constant 0 : index
    %c0_7 = arith.constant 0 : index
    %9 = vector.load %arg4[%c0_6, %c0_7] : memref<32x128xbf16, #tpu.memory_space<vmem>>, vector<32x128xbf16>
    tpu.vector_store %arg4[%c0_6, %c0_7], %8 {strides = array<i32>} : memref<32x128xbf16, #tpu.memory_space<vmem>>, vector<32x128xbf16>,
    return
  }
  func.func @transform_0(%arg0: i32) -> (i32, i32) {
    %c0_i32 = arith.constant 0 : i32
    %c0_i32_0 = arith.constant 0 : i32
    %c0_i32_1 = arith.constant 0 : i32
    return %c0_i32, %c0_i32_0 : i32, i32
  }
  func.func @transform_1(%arg0: i32) -> (i32, i32) {
    %c0_i32 = arith.constant 0 : i32
    %c0_i32_0 = arith.constant 0 : i32
    %c0_i32_1 = arith.constant 0 : i32
    return %c0_i32, %c0_i32_0 : i32, i32
  }
  func.func @transform_2(%arg0: i32) -> (i32, i32) {
    %c0_i32 = arith.constant 0 : i32
    %c0_i32_0 = arith.constant 0 : i32
    return %c0_i32, %arg0 : i32, i32
  }
  func.func @transform_3(%arg0: i32) -> (i32, i32) {
    %c0_i32 = arith.constant 0 : i32
    %c0_i32_0 = arith.constant 0 : i32
    return %c0_i32, %arg0 : i32, i32
  }
}

module attributes {stable_mosaic.version = 11 : i64} {
  func.func @_tail_kernel(%arg0: i32, %arg1: memref<18x512xbf16, #tpu.memory_space<vmem>>, %arg2: memref<512x64xbf16, #tpu.memory_space<vmem>>, %arg3: memref<1x64xf32, #tpu.memory_space<vmem>>, %arg4: memref<9x64x64xbf16, #tpu.memory_space<vmem>>, %arg5: memref<1x64xf32, #tpu.memory_space<vmem>>, %arg6: memref<1x64x512xbf16, #tpu.memory_space<vmem>>, %arg7: memref<1x512xf32, #tpu.memory_space<vmem>>, %arg8: memref<512x128xbf16, #tpu.memory_space<vmem>>, %arg9: memref<1x128xf32, #tpu.memory_space<vmem>>, %arg10: memref<2x128xf32, #tpu.memory_space<vmem>>, %arg11: memref<2x9x64xbf16, #tpu.memory_space<vmem>>) attributes {dimension_semantics = [#tpu.dimension_semantics<parallel>], iteration_bounds = array<i64: 1>, scalar_prefetch = 0 : i64, scratch_operands = 1 : i64, tpu.core_type = #tpu.core_type<tc>, window_params = [{transform_indices = @transform_0, window_bounds = array<i64: 18, 512>}, {pipeline_mode = #tpu.pipeline_mode<synchronous>, transform_indices = @transform_1, window_bounds = array<i64: 512, 64>}, {pipeline_mode = #tpu.pipeline_mode<synchronous>, transform_indices = @transform_2, window_bounds = array<i64: 1, 64>}, {pipeline_mode = #tpu.pipeline_mode<synchronous>, transform_indices = @transform_3, window_bounds = array<i64: 9, 64, 64>}, {pipeline_mode = #tpu.pipeline_mode<synchronous>, transform_indices = @transform_4, window_bounds = array<i64: 1, 64>}, {pipeline_mode = #tpu.pipeline_mode<synchronous>, transform_indices = @transform_5, window_bounds = array<i64: 1, 64, 512>}, {pipeline_mode = #tpu.pipeline_mode<synchronous>, transform_indices = @transform_6, window_bounds = array<i64: 1, 512>}, {pipeline_mode = #tpu.pipeline_mode<synchronous>, transform_indices = @transform_7, window_bounds = array<i64: 512, 128>}, {pipeline_mode = #tpu.pipeline_mode<synchronous>, transform_indices = @transform_8, window_bounds = array<i64: 1, 128>}, {transform_indices = @transform_9, window_bounds = array<i64: 2, 128>}]} {
    %c0 = arith.constant 0 : index
    %c0_0 = arith.constant 0 : index
    %0 = vector.load %arg1[%c0, %c0_0] : memref<18x512xbf16, #tpu.memory_space<vmem>>, vector<18x512xbf16>
    %c0_1 = arith.constant 0 : index
    %c0_2 = arith.constant 0 : index
    %1 = vector.load %arg2[%c0_1, %c0_2] : memref<512x64xbf16, #tpu.memory_space<vmem>>, vector<512x64xbf16>
    %cst = arith.constant dense<0.000000e+00> : vector<18x64xf32>
    %2 = tpu.matmul %0, %1, %cst {dimension_numbers = #tpu.dot_dimension_numbers<[1], [0], [0], [1], [0, 0, 1, 1], [], []>} : vector<18x512xbf16>, vector<512x64xbf16>, vector<18x64xf32> -> vector<18x64xf32>
    %c0_3 = arith.constant 0 : index
    %c0_4 = arith.constant 0 : index
    %3 = vector.load %arg3[%c0_3, %c0_4] : memref<1x64xf32, #tpu.memory_space<vmem>>, vector<1x64xf32>
    %4 = vector.broadcast %3 : vector<1x64xf32> to vector<18x64xf32>
    %5 = arith.addf %2, %4 : vector<18x64xf32>
    %cst_5 = arith.constant 0.000000e+00 : f32
    %6 = vector.broadcast %cst_5 : f32 to vector<18x64xf32>
    %7 = arith.maximumf %5, %6 : vector<18x64xf32>
    %8 = arith.truncf %7 : vector<18x64xf32> to vector<18x64xbf16>
    %cst_6 = arith.constant 0.000000e+00 : f32
    %9 = vector.broadcast %cst_6 : f32 to vector<10x64xf32>
    %10 = vector.extract_strided_slice %8 {offsets = [0, 0], sizes = [10, 64], strides = [1, 1]} : vector<18x64xbf16> to vector<10x64xbf16>
    %c0_7 = arith.constant 0 : index
    %c0_8 = arith.constant 0 : index
    %c0_9 = arith.constant 0 : index
    %11 = vector.load %arg4[%c0_7, %c0_8, %c0_9] : memref<9x64x64xbf16, #tpu.memory_space<vmem>>, vector<1x64x64xbf16>
    %12 = vector.shape_cast %11 : vector<1x64x64xbf16> to vector<64x64xbf16>
    %cst_10 = arith.constant dense<0.000000e+00> : vector<10x64xf32>
    %13 = tpu.matmul %10, %12, %cst_10 {dimension_numbers = #tpu.dot_dimension_numbers<[1], [0], [0], [1], [0, 0, 1, 1], [], []>} : vector<10x64xbf16>, vector<64x64xbf16>, vector<10x64xf32> -> vector<10x64xf32>
    %14 = arith.addf %9, %13 : vector<10x64xf32>
    %15 = vector.extract_strided_slice %8 {offsets = [1, 0], sizes = [10, 64], strides = [1, 1]} : vector<18x64xbf16> to vector<10x64xbf16>
    %c1 = arith.constant 1 : index
    %c0_11 = arith.constant 0 : index
    %c0_12 = arith.constant 0 : index
    %16 = vector.load %arg4[%c1, %c0_11, %c0_12] : memref<9x64x64xbf16, #tpu.memory_space<vmem>>, vector<1x64x64xbf16>
    %17 = vector.shape_cast %16 : vector<1x64x64xbf16> to vector<64x64xbf16>
    %cst_13 = arith.constant dense<0.000000e+00> : vector<10x64xf32>
    %18 = tpu.matmul %15, %17, %cst_13 {dimension_numbers = #tpu.dot_dimension_numbers<[1], [0], [0], [1], [0, 0, 1, 1], [], []>} : vector<10x64xbf16>, vector<64x64xbf16>, vector<10x64xf32> -> vector<10x64xf32>
    %19 = arith.addf %14, %18 : vector<10x64xf32>
    %20 = vector.extract_strided_slice %8 {offsets = [2, 0], sizes = [10, 64], strides = [1, 1]} : vector<18x64xbf16> to vector<10x64xbf16>
    %c2 = arith.constant 2 : index
    %c0_14 = arith.constant 0 : index
    %c0_15 = arith.constant 0 : index
    %21 = vector.load %arg4[%c2, %c0_14, %c0_15] : memref<9x64x64xbf16, #tpu.memory_space<vmem>>, vector<1x64x64xbf16>
    %22 = vector.shape_cast %21 : vector<1x64x64xbf16> to vector<64x64xbf16>
    %cst_16 = arith.constant dense<0.000000e+00> : vector<10x64xf32>
    %23 = tpu.matmul %20, %22, %cst_16 {dimension_numbers = #tpu.dot_dimension_numbers<[1], [0], [0], [1], [0, 0, 1, 1], [], []>} : vector<10x64xbf16>, vector<64x64xbf16>, vector<10x64xf32> -> vector<10x64xf32>
    %24 = arith.addf %19, %23 : vector<10x64xf32>
    %25 = vector.extract_strided_slice %8 {offsets = [3, 0], sizes = [10, 64], strides = [1, 1]} : vector<18x64xbf16> to vector<10x64xbf16>
    %c3 = arith.constant 3 : index
    %c0_17 = arith.constant 0 : index
    %c0_18 = arith.constant 0 : index
    %26 = vector.load %arg4[%c3, %c0_17, %c0_18] : memref<9x64x64xbf16, #tpu.memory_space<vmem>>, vector<1x64x64xbf16>
    %27 = vector.shape_cast %26 : vector<1x64x64xbf16> to vector<64x64xbf16>
    %cst_19 = arith.constant dense<0.000000e+00> : vector<10x64xf32>
    %28 = tpu.matmul %25, %27, %cst_19 {dimension_numbers = #tpu.dot_dimension_numbers<[1], [0], [0], [1], [0, 0, 1, 1], [], []>} : vector<10x64xbf16>, vector<64x64xbf16>, vector<10x64xf32> -> vector<10x64xf32>
    %29 = arith.addf %24, %28 : vector<10x64xf32>
    %30 = vector.extract_strided_slice %8 {offsets = [4, 0], sizes = [10, 64], strides = [1, 1]} : vector<18x64xbf16> to vector<10x64xbf16>
    %c4 = arith.constant 4 : index
    %c0_20 = arith.constant 0 : index
    %c0_21 = arith.constant 0 : index
    %31 = vector.load %arg4[%c4, %c0_20, %c0_21] : memref<9x64x64xbf16, #tpu.memory_space<vmem>>, vector<1x64x64xbf16>
    %32 = vector.shape_cast %31 : vector<1x64x64xbf16> to vector<64x64xbf16>
    %cst_22 = arith.constant dense<0.000000e+00> : vector<10x64xf32>
    %33 = tpu.matmul %30, %32, %cst_22 {dimension_numbers = #tpu.dot_dimension_numbers<[1], [0], [0], [1], [0, 0, 1, 1], [], []>} : vector<10x64xbf16>, vector<64x64xbf16>, vector<10x64xf32> -> vector<10x64xf32>
    %34 = arith.addf %29, %33 : vector<10x64xf32>
    %35 = vector.extract_strided_slice %8 {offsets = [5, 0], sizes = [10, 64], strides = [1, 1]} : vector<18x64xbf16> to vector<10x64xbf16>
    %c5 = arith.constant 5 : index
    %c0_23 = arith.constant 0 : index
    %c0_24 = arith.constant 0 : index
    %36 = vector.load %arg4[%c5, %c0_23, %c0_24] : memref<9x64x64xbf16, #tpu.memory_space<vmem>>, vector<1x64x64xbf16>
    %37 = vector.shape_cast %36 : vector<1x64x64xbf16> to vector<64x64xbf16>
    %cst_25 = arith.constant dense<0.000000e+00> : vector<10x64xf32>
    %38 = tpu.matmul %35, %37, %cst_25 {dimension_numbers = #tpu.dot_dimension_numbers<[1], [0], [0], [1], [0, 0, 1, 1], [], []>} : vector<10x64xbf16>, vector<64x64xbf16>, vector<10x64xf32> -> vector<10x64xf32>
    %39 = arith.addf %34, %38 : vector<10x64xf32>
    %40 = vector.extract_strided_slice %8 {offsets = [6, 0], sizes = [10, 64], strides = [1, 1]} : vector<18x64xbf16> to vector<10x64xbf16>
    %c6 = arith.constant 6 : index
    %c0_26 = arith.constant 0 : index
    %c0_27 = arith.constant 0 : index
    %41 = vector.load %arg4[%c6, %c0_26, %c0_27] : memref<9x64x64xbf16, #tpu.memory_space<vmem>>, vector<1x64x64xbf16>
    %42 = vector.shape_cast %41 : vector<1x64x64xbf16> to vector<64x64xbf16>
    %cst_28 = arith.constant dense<0.000000e+00> : vector<10x64xf32>
    %43 = tpu.matmul %40, %42, %cst_28 {dimension_numbers = #tpu.dot_dimension_numbers<[1], [0], [0], [1], [0, 0, 1, 1], [], []>} : vector<10x64xbf16>, vector<64x64xbf16>, vector<10x64xf32> -> vector<10x64xf32>
    %44 = arith.addf %39, %43 : vector<10x64xf32>
    %45 = vector.extract_strided_slice %8 {offsets = [7, 0], sizes = [10, 64], strides = [1, 1]} : vector<18x64xbf16> to vector<10x64xbf16>
    %c7 = arith.constant 7 : index
    %c0_29 = arith.constant 0 : index
    %c0_30 = arith.constant 0 : index
    %46 = vector.load %arg4[%c7, %c0_29, %c0_30] : memref<9x64x64xbf16, #tpu.memory_space<vmem>>, vector<1x64x64xbf16>
    %47 = vector.shape_cast %46 : vector<1x64x64xbf16> to vector<64x64xbf16>
    %cst_31 = arith.constant dense<0.000000e+00> : vector<10x64xf32>
    %48 = tpu.matmul %45, %47, %cst_31 {dimension_numbers = #tpu.dot_dimension_numbers<[1], [0], [0], [1], [0, 0, 1, 1], [], []>} : vector<10x64xbf16>, vector<64x64xbf16>, vector<10x64xf32> -> vector<10x64xf32>
    %49 = arith.addf %44, %48 : vector<10x64xf32>
    %50 = vector.extract_strided_slice %8 {offsets = [8, 0], sizes = [10, 64], strides = [1, 1]} : vector<18x64xbf16> to vector<10x64xbf16>
    %c8 = arith.constant 8 : index
    %c0_32 = arith.constant 0 : index
    %c0_33 = arith.constant 0 : index
    %51 = vector.load %arg4[%c8, %c0_32, %c0_33] : memref<9x64x64xbf16, #tpu.memory_space<vmem>>, vector<1x64x64xbf16>
    %52 = vector.shape_cast %51 : vector<1x64x64xbf16> to vector<64x64xbf16>
    %cst_34 = arith.constant dense<0.000000e+00> : vector<10x64xf32>
    %53 = tpu.matmul %50, %52, %cst_34 {dimension_numbers = #tpu.dot_dimension_numbers<[1], [0], [0], [1], [0, 0, 1, 1], [], []>} : vector<10x64xbf16>, vector<64x64xbf16>, vector<10x64xf32> -> vector<10x64xf32>
    %54 = arith.addf %49, %53 : vector<10x64xf32>
    %c0_35 = arith.constant 0 : index
    %c0_36 = arith.constant 0 : index
    %55 = vector.load %arg5[%c0_35, %c0_36] : memref<1x64xf32, #tpu.memory_space<vmem>>, vector<1x64xf32>
    %56 = vector.broadcast %55 : vector<1x64xf32> to vector<10x64xf32>
    %57 = arith.addf %54, %56 : vector<10x64xf32>
    %cst_37 = arith.constant 0.000000e+00 : f32
    %58 = vector.broadcast %cst_37 : f32 to vector<10x64xf32>
    %59 = arith.maximumf %57, %58 : vector<10x64xf32>
    %60 = arith.truncf %59 : vector<10x64xf32> to vector<10x64xbf16>
    %61 = vector.extract_strided_slice %60 {offsets = [0, 0], sizes = [9, 64], strides = [1, 1]} : vector<10x64xbf16> to vector<9x64xbf16>
    %c0_38 = arith.constant 0 : index
    %c0_39 = arith.constant 0 : index
    %c0_40 = arith.constant 0 : index
    %62 = vector.load %arg11[%c0_38, %c0_39, %c0_40] : memref<2x9x64xbf16, #tpu.memory_space<vmem>>, vector<1x9x64xbf16>
    %63 = vector.shape_cast %62 : vector<1x9x64xbf16> to vector<9x64xbf16>
    %64 = vector.shape_cast %61 : vector<9x64xbf16> to vector<1x9x64xbf16>
    tpu.vector_store %arg11[%c0_38, %c0_39, %c0_40], %64 {strides = array<i32>} : memref<2x9x64xbf16, #tpu.memory_space<vmem>>, vector<1x9x64xbf16>,
    %65 = vector.extract_strided_slice %60 {offsets = [9, 0], sizes = [1, 64], strides = [1, 1]} : vector<10x64xbf16> to vector<1x64xbf16>
    %c1_41 = arith.constant 1 : index
    %c0_42 = arith.constant 0 : index
    %c0_43 = arith.constant 0 : index
    %66 = vector.load %arg11[%c1_41, %c0_42, %c0_43] : memref<2x9x64xbf16, #tpu.memory_space<vmem>>, vector<1x1x64xbf16>
    %67 = vector.shape_cast %66 : vector<1x1x64xbf16> to vector<1x64xbf16>
    %68 = vector.shape_cast %65 : vector<1x64xbf16> to vector<1x1x64xbf16>
    tpu.vector_store %arg11[%c1_41, %c0_42, %c0_43], %68 {strides = array<i32>} : memref<2x9x64xbf16, #tpu.memory_space<vmem>>, vector<1x1x64xbf16>,
    %cst_44 = arith.constant 0.000000e+00 : f32
    %69 = vector.broadcast %cst_44 : f32 to vector<2x512xf32>
    %c0_45 = arith.constant 0 : index
    %c0_46 = arith.constant 0 : index
    %c0_47 = arith.constant 0 : index
    %70 = vector.load %arg11[%c0_45, %c0_46, %c0_47] : memref<2x9x64xbf16, #tpu.memory_space<vmem>>, vector<2x1x64xbf16>
    %71 = vector.shape_cast %70 : vector<2x1x64xbf16> to vector<2x64xbf16>
    %c0_48 = arith.constant 0 : index
    %c0_49 = arith.constant 0 : index
    %c0_50 = arith.constant 0 : index
    %72 = vector.load %arg6[%c0_48, %c0_49, %c0_50] : memref<1x64x512xbf16, #tpu.memory_space<vmem>>, vector<1x64x512xbf16>
    %73 = vector.shape_cast %72 : vector<1x64x512xbf16> to vector<64x512xbf16>
    %cst_51 = arith.constant dense<0.000000e+00> : vector<2x512xf32>
    %74 = tpu.matmul %71, %73, %cst_51 {dimension_numbers = #tpu.dot_dimension_numbers<[1], [0], [0], [1], [0, 0, 1, 1], [], []>} : vector<2x64xbf16>, vector<64x512xbf16>, vector<2x512xf32> -> vector<2x512xf32>
    %75 = arith.addf %69, %74 : vector<2x512xf32>
    %c0_52 = arith.constant 0 : index
    %c0_53 = arith.constant 0 : index
    %76 = vector.load %arg7[%c0_52, %c0_53] : memref<1x512xf32, #tpu.memory_space<vmem>>, vector<1x512xf32>
    %77 = vector.broadcast %76 : vector<1x512xf32> to vector<2x512xf32>
    %78 = arith.addf %75, %77 : vector<2x512xf32>
    %cst_54 = arith.constant 0.000000e+00 : f32
    %79 = vector.broadcast %cst_54 : f32 to vector<2x512xf32>
    %80 = arith.maximumf %78, %79 : vector<2x512xf32>
    %81 = arith.truncf %80 : vector<2x512xf32> to vector<2x512xbf16>
    %c0_55 = arith.constant 0 : index
    %c0_56 = arith.constant 0 : index
    %82 = vector.load %arg8[%c0_55, %c0_56] : memref<512x128xbf16, #tpu.memory_space<vmem>>, vector<512x128xbf16>
    %cst_57 = arith.constant dense<0.000000e+00> : vector<2x128xf32>
    %83 = tpu.matmul %81, %82, %cst_57 {dimension_numbers = #tpu.dot_dimension_numbers<[1], [0], [0], [1], [0, 0, 1, 1], [], []>} : vector<2x512xbf16>, vector<512x128xbf16>, vector<2x128xf32> -> vector<2x128xf32>
    %c0_58 = arith.constant 0 : index
    %c0_59 = arith.constant 0 : index
    %84 = vector.load %arg9[%c0_58, %c0_59] : memref<1x128xf32, #tpu.memory_space<vmem>>, vector<1x128xf32>
    %85 = vector.broadcast %84 : vector<1x128xf32> to vector<2x128xf32>
    %86 = arith.addf %83, %85 : vector<2x128xf32>
    %87 = tpu.iota {dimensions = array<i32: 1>} : vector<2x128xi32>
    %cst_60 = arith.constant 0.000000e+00 : f32
    %88 = vector.broadcast %cst_60 : f32 to vector<2x128xf32>
    %c0_i32 = arith.constant 0 : i32
    %89 = vector.broadcast %c0_i32 : i32 to vector<2x128xi32>
    %90 = arith.cmpi sge, %87, %89 : vector<2x128xi32>
    %c4_i32 = arith.constant 4 : i32
    %91 = vector.broadcast %c4_i32 : i32 to vector<2x128xi32>
    %92 = arith.cmpi slt, %87, %91 : vector<2x128xi32>
    %93 = arith.andi %90, %92 : vector<2x128xi1>
    %cst_61 = arith.constant 0xFF800000 : f32
    %94 = vector.broadcast %cst_61 : f32 to vector<2x128xf32>
    %95 = arith.select %93, %86, %94 : vector<2x128xi1>, vector<2x128xf32>
    %cst_62 = arith.constant dense<0xFF800000> : vector<2xf32>
    %96 = vector.multi_reduction <maximumf>, %95, %cst_62 [1] : vector<2x128xf32> to vector<2xf32>
    %97 = vector.shape_cast %96 : vector<2xf32> to vector<2x1xf32>
    %98 = vector.broadcast %97 : vector<2x1xf32> to vector<2x128xf32>
    %99 = arith.subf %95, %98 : vector<2x128xf32>
    %100 = math.exp %99 : vector<2x128xf32>
    %cst_63 = arith.constant 0.000000e+00 : f32
    %101 = vector.broadcast %cst_63 : f32 to vector<2x128xf32>
    %102 = arith.select %93, %100, %101 : vector<2x128xi1>, vector<2x128xf32>
    %cst_64 = arith.constant dense<0.000000e+00> : vector<2xf32>
    %103 = vector.multi_reduction <add>, %102, %cst_64 [1] : vector<2x128xf32> to vector<2xf32>
    %104 = vector.shape_cast %103 : vector<2xf32> to vector<2x1xf32>
    %105 = vector.broadcast %104 : vector<2x1xf32> to vector<2x128xf32>
    %106 = arith.divf %102, %105 : vector<2x128xf32>
    %107 = arith.addf %88, %106 : vector<2x128xf32>
    %c4_i32_65 = arith.constant 4 : i32
    %108 = vector.broadcast %c4_i32_65 : i32 to vector<2x128xi32>
    %109 = arith.cmpi sge, %87, %108 : vector<2x128xi32>
    %c7_i32 = arith.constant 7 : i32
    %110 = vector.broadcast %c7_i32 : i32 to vector<2x128xi32>
    %111 = arith.cmpi slt, %87, %110 : vector<2x128xi32>
    %112 = arith.andi %109, %111 : vector<2x128xi1>
    %cst_66 = arith.constant 0xFF800000 : f32
    %113 = vector.broadcast %cst_66 : f32 to vector<2x128xf32>
    %114 = arith.select %112, %86, %113 : vector<2x128xi1>, vector<2x128xf32>
    %cst_67 = arith.constant dense<0xFF800000> : vector<2xf32>
    %115 = vector.multi_reduction <maximumf>, %114, %cst_67 [1] : vector<2x128xf32> to vector<2xf32>
    %116 = vector.shape_cast %115 : vector<2xf32> to vector<2x1xf32>
    %117 = vector.broadcast %116 : vector<2x1xf32> to vector<2x128xf32>
    %118 = arith.subf %114, %117 : vector<2x128xf32>
    %119 = math.exp %118 : vector<2x128xf32>
    %cst_68 = arith.constant 0.000000e+00 : f32
    %120 = vector.broadcast %cst_68 : f32 to vector<2x128xf32>
    %121 = arith.select %112, %119, %120 : vector<2x128xi1>, vector<2x128xf32>
    %cst_69 = arith.constant dense<0.000000e+00> : vector<2xf32>
    %122 = vector.multi_reduction <add>, %121, %cst_69 [1] : vector<2x128xf32> to vector<2xf32>
    %123 = vector.shape_cast %122 : vector<2xf32> to vector<2x1xf32>
    %124 = vector.broadcast %123 : vector<2x1xf32> to vector<2x128xf32>
    %125 = arith.divf %121, %124 : vector<2x128xf32>
    %126 = arith.addf %107, %125 : vector<2x128xf32>
    %c0_70 = arith.constant 0 : index
    %c0_71 = arith.constant 0 : index
    %127 = vector.load %arg10[%c0_70, %c0_71] : memref<2x128xf32, #tpu.memory_space<vmem>>, vector<2x128xf32>
    tpu.vector_store %arg10[%c0_70, %c0_71], %126 {strides = array<i32>} : memref<2x128xf32, #tpu.memory_space<vmem>>, vector<2x128xf32>,
    return
  }
  func.func @transform_0(%arg0: i32) -> (i32, i32) {
    %c0_i32 = arith.constant 0 : i32
    %c0_i32_0 = arith.constant 0 : i32
    return %arg0, %c0_i32 : i32, i32
  }
  func.func @transform_1(%arg0: i32) -> (i32, i32) {
    %c0_i32 = arith.constant 0 : i32
    %c0_i32_0 = arith.constant 0 : i32
    %c0_i32_1 = arith.constant 0 : i32
    return %c0_i32, %c0_i32_0 : i32, i32
  }
  func.func @transform_2(%arg0: i32) -> (i32, i32) {
    %c0_i32 = arith.constant 0 : i32
    %c0_i32_0 = arith.constant 0 : i32
    %c0_i32_1 = arith.constant 0 : i32
    return %c0_i32, %c0_i32_0 : i32, i32
  }
  func.func @transform_3(%arg0: i32) -> (i32, i32, i32) {
    %c0_i32 = arith.constant 0 : i32
    %c0_i32_0 = arith.constant 0 : i32
    %c0_i32_1 = arith.constant 0 : i32
    %c0_i32_2 = arith.constant 0 : i32
    return %c0_i32, %c0_i32_0, %c0_i32_1 : i32, i32, i32
  }
  func.func @transform_4(%arg0: i32) -> (i32, i32) {
    %c0_i32 = arith.constant 0 : i32
    %c0_i32_0 = arith.constant 0 : i32
    %c0_i32_1 = arith.constant 0 : i32
    return %c0_i32, %c0_i32_0 : i32, i32
  }
  func.func @transform_5(%arg0: i32) -> (i32, i32, i32) {
    %c0_i32 = arith.constant 0 : i32
    %c0_i32_0 = arith.constant 0 : i32
    %c0_i32_1 = arith.constant 0 : i32
    %c0_i32_2 = arith.constant 0 : i32
    return %c0_i32, %c0_i32_0, %c0_i32_1 : i32, i32, i32
  }
  func.func @transform_6(%arg0: i32) -> (i32, i32) {
    %c0_i32 = arith.constant 0 : i32
    %c0_i32_0 = arith.constant 0 : i32
    %c0_i32_1 = arith.constant 0 : i32
    return %c0_i32, %c0_i32_0 : i32, i32
  }
  func.func @transform_7(%arg0: i32) -> (i32, i32) {
    %c0_i32 = arith.constant 0 : i32
    %c0_i32_0 = arith.constant 0 : i32
    %c0_i32_1 = arith.constant 0 : i32
    return %c0_i32, %c0_i32_0 : i32, i32
  }
  func.func @transform_8(%arg0: i32) -> (i32, i32) {
    %c0_i32 = arith.constant 0 : i32
    %c0_i32_0 = arith.constant 0 : i32
    %c0_i32_1 = arith.constant 0 : i32
    return %c0_i32, %c0_i32_0 : i32, i32
  }
  func.func @transform_9(%arg0: i32) -> (i32, i32) {
    %c0_i32 = arith.constant 0 : i32
    %c0_i32_0 = arith.constant 0 : i32
    return %arg0, %c0_i32 : i32, i32
  }
}

</mosaic_0001>

<llo_original>
// kernel: actor_forward.2
$region0: #{actor_forward.2}
  #allocation0 [shape = 'u32[]', space=smem, size = 0x4, offset = 0x4, fixed_abs, tag = 'smem constant byte address 0x4 - core index']
  #allocation1 [shape = 'u32[144,128]{1,0:T(1,128)}', space=vmem, size = 0x12000, scoped, tag = 'internal scratch']
  %s0 = inlined_call_operand.vmem [shape: bf16[32,768], index: 0, kind: input, shape index: {}]
  %s1 = inlined_call_operand.vmem [shape: f32[32,1], index: 1, kind: input, shape index: {}]
  %s2 = inlined_call_operand.vmem [shape: bf16[768,128], index: 2, kind: input, shape index: {}]
  %s3 = inlined_call_operand.vmem [shape: bf16[32,128], index: 3, kind: output, shape index: {}]
  %s4 = sld [smem:[#allocation0]]
  $region22: #{actor_forward.2} parent=0
    _
  %s6 = ssub.s32 1, %s4
  %s7 = scalar_select 0, %s6, %s4
  // Predicated region
  $region2: #{actor_forward.2} parent=0 // pred_check
    _
  $region3: #{actor_forward.2} parent=0 // pred_check_branch
    %9 = sbr.rel (0) target = $region5
  $region4: #{actor_forward.2} parent=0 // pred_region
    _
  $region5: #{actor_forward.2} parent=0 // pred_fallthru
    _
  // Predicated region
  $region6: #{actor_forward.2} parent=0 // pred_check
    _
  $region7: #{actor_forward.2} parent=0 // pred_check_branch
    %11 = sbr.rel (0) target = $region9
  $region8: #{actor_forward.2} parent=0 // pred_region
    _
  $region9: #{actor_forward.2} parent=0 // pred_fallthru
    _
  // Predicated region
  $region10: #{actor_forward.2} parent=0 // pred_check
    _
  $region11: #{actor_forward.2} parent=0 // pred_check_branch
    %13 = sbr.rel (0) target = $region13
  $region12: #{actor_forward.2} parent=0 // pred_region
    _
  $region13: #{actor_forward.2} parent=0 // pred_fallthru
    _
  %v15 = vld [vmem:[%s0] sm:$0xff]
  %v16 = vld [vmem:[%s0 + $0x8] sm:$0xff]
  %v17 = vld [vmem:[%s0 + $0x10] sm:$0xff]
  %v18 = vld [vmem:[%s0 + $0x18] sm:$0xff]
  %v19 = vld [vmem:[%s0 + $0x20] sm:$0xff]
  %v20 = vld [vmem:[%s0 + $0x28] sm:$0xff]
  %v21 = vld [vmem:[%s0 + $0x30] sm:$0xff]
  %v22 = vld [vmem:[%s0 + $0x38] sm:$0xff]
  %v23 = vld [vmem:[%s0 + $0x40] sm:$0xff]
  %v24 = vld [vmem:[%s0 + $0x48] sm:$0xff]
  %v25 = vld [vmem:[%s0 + $0x50] sm:$0xff]
  %v26 = vld [vmem:[%s0 + $0x58] sm:$0xff]
  %v27 = vld [vmem:[%s2] sm:$0xf]
  %v28 = vld [vmem:[%s2 + $0x4] sm:$0xf]
  %v29 = vld [vmem:[%s2 + $0x8] sm:$0xf]
  %v30 = vld [vmem:[%s2 + $0xc] sm:$0xf]
  %v31 = vld [vmem:[%s2 + $0x10] sm:$0xf]
  %v32 = vld [vmem:[%s2 + $0x14] sm:$0xf]
  %v33 = vld [vmem:[%s2 + $0x18] sm:$0xf]
  %v34 = vld [vmem:[%s2 + $0x1c] sm:$0xf]
  %v35 = vld [vmem:[%s2 + $0x20] sm:$0xf]
  %v36 = vld [vmem:[%s2 + $0x24] sm:$0xf]
  %v37 = vld [vmem:[%s2 + $0x28] sm:$0xf]
  %v38 = vld [vmem:[%s2 + $0x2c] sm:$0xf]
  %v39 = vld [vmem:[%s2 + $0x30] sm:$0xf]
  %v40 = vld [vmem:[%s2 + $0x34] sm:$0xf]
  %v41 = vld [vmem:[%s2 + $0x38] sm:$0xf]
  %v42 = vld [vmem:[%s2 + $0x3c] sm:$0xf]
  %v43 = vld [vmem:[%s2 + $0x40] sm:$0xf]
  %v44 = vld [vmem:[%s2 + $0x44] sm:$0xf]
  %v45 = vld [vmem:[%s2 + $0x48] sm:$0xf]
  %v46 = vld [vmem:[%s2 + $0x4c] sm:$0xf]
  %v47 = vld [vmem:[%s2 + $0x50] sm:$0xf]
  %v48 = vld [vmem:[%s2 + $0x54] sm:$0xf]
  %v49 = vld [vmem:[%s2 + $0x58] sm:$0xf]
  %v50 = vld [vmem:[%s2 + $0x5c] sm:$0xf]
  %v51 = vld [vmem:[%s2 + $0x60] sm:$0xf]
  %v52 = vld [vmem:[%s2 + $0x64] sm:$0xf]
  %v53 = vld [vmem:[%s2 + $0x68] sm:$0xf]
  %v54 = vld [vmem:[%s2 + $0x6c] sm:$0xf]
  %v55 = vld [vmem:[%s2 + $0x70] sm:$0xf]
  %v56 = vld [vmem:[%s2 + $0x74] sm:$0xf]
  %v57 = vld [vmem:[%s2 + $0x78] sm:$0xf]
  %v58 = vld [vmem:[%s2 + $0x7c] sm:$0xf]
  %v59 = vld [vmem:[%s2 + $0x80] sm:$0xf]
  %v60 = vld [vmem:[%s2 + $0x84] sm:$0xf]
  %v61 = vld [vmem:[%s2 + $0x88] sm:$0xf]
  %v62 = vld [vmem:[%s2 + $0x8c] sm:$0xf]
  %v63 = vld [vmem:[%s2 + $0x90] sm:$0xf]
  %v64 = vld [vmem:[%s2 + $0x94] sm:$0xf]
  %v65 = vld [vmem:[%s2 + $0x98] sm:$0xf]
  %v66 = vld [vmem:[%s2 + $0x9c] sm:$0xf]
  %v67 = vld [vmem:[%s2 + $0xa0] sm:$0xf]
  %v68 = vld [vmem:[%s2 + $0xa4] sm:$0xf]
  %v69 = vld [vmem:[%s2 + $0xa8] sm:$0xf]
  %v70 = vld [vmem:[%s2 + $0xac] sm:$0xf]
  %v71 = vld [vmem:[%s2 + $0xb0] sm:$0xf]
  %v72 = vld [vmem:[%s2 + $0xb4] sm:$0xf]
  %v73 = vld [vmem:[%s2 + $0xb8] sm:$0xf]
  %v74 = vld [vmem:[%s2 + $0xbc] sm:$0xf]
  %v75 = vld [vmem:[%s2 + $0xc0] sm:$0xf]
  %v76 = vld [vmem:[%s2 + $0xc4] sm:$0xf]
  %v77 = vld [vmem:[%s2 + $0xc8] sm:$0xf]
  %v78 = vld [vmem:[%s2 + $0xcc] sm:$0xf]
  %v79 = vld [vmem:[%s2 + $0xd0] sm:$0xf]
  %v80 = vld [vmem:[%s2 + $0xd4] sm:$0xf]
  %v81 = vld [vmem:[%s2 + $0xd8] sm:$0xf]
  %v82 = vld [vmem:[%s2 + $0xdc] sm:$0xf]
  %v83 = vld [vmem:[%s2 + $0xe0] sm:$0xf]
  %v84 = vld [vmem:[%s2 + $0xe4] sm:$0xf]
  %v85 = vld [vmem:[%s2 + $0xe8] sm:$0xf]
  %v86 = vld [vmem:[%s2 + $0xec] sm:$0xf]
  %v87 = vld [vmem:[%s2 + $0xf0] sm:$0xf]
  %v88 = vld [vmem:[%s2 + $0xf4] sm:$0xf]
  %v89 = vld [vmem:[%s2 + $0xf8] sm:$0xf]
  %v90 = vld [vmem:[%s2 + $0xfc] sm:$0xf]
  %v91 = vld [vmem:[%s2 + $0x100] sm:$0xf]
  %v92 = vld [vmem:[%s2 + $0x104] sm:$0xf]
  %v93 = vld [vmem:[%s2 + $0x108] sm:$0xf]
  %v94 = vld [vmem:[%s2 + $0x10c] sm:$0xf]
  %v95 = vld [vmem:[%s2 + $0x110] sm:$0xf]
  %v96 = vld [vmem:[%s2 + $0x114] sm:$0xf]
  %v97 = vld [vmem:[%s2 + $0x118] sm:$0xf]
  %v98 = vld [vmem:[%s2 + $0x11c] sm:$0xf]
  %v99 = vld [vmem:[%s2 + $0x120] sm:$0xf]
  %v100 = vld [vmem:[%s2 + $0x124] sm:$0xf]
  %v101 = vld [vmem:[%s2 + $0x128] sm:$0xf]
  %v102 = vld [vmem:[%s2 + $0x12c] sm:$0xf]
  %v103 = vld [vmem:[%s2 + $0x130] sm:$0xf]
  %v104 = vld [vmem:[%s2 + $0x134] sm:$0xf]
  %v105 = vld [vmem:[%s2 + $0x138] sm:$0xf]
  %v106 = vld [vmem:[%s2 + $0x13c] sm:$0xf]
  %v107 = vld [vmem:[%s2 + $0x140] sm:$0xf]
  %v108 = vld [vmem:[%s2 + $0x144] sm:$0xf]
  %v109 = vld [vmem:[%s2 + $0x148] sm:$0xf]
  %v110 = vld [vmem:[%s2 + $0x14c] sm:$0xf]
  %v111 = vld [vmem:[%s2 + $0x150] sm:$0xf]
  %v112 = vld [vmem:[%s2 + $0x154] sm:$0xf]
  %v113 = vld [vmem:[%s2 + $0x158] sm:$0xf]
  %v114 = vld [vmem:[%s2 + $0x15c] sm:$0xf]
  %v115 = vld [vmem:[%s2 + $0x160] sm:$0xf]
  %v116 = vld [vmem:[%s2 + $0x164] sm:$0xf]
  %v117 = vld [vmem:[%s2 + $0x168] sm:$0xf]
  %v118 = vld [vmem:[%s2 + $0x16c] sm:$0xf]
  %v119 = vld [vmem:[%s2 + $0x170] sm:$0xf]
  %v120 = vld [vmem:[%s2 + $0x174] sm:$0xf]
  %v121 = vld [vmem:[%s2 + $0x178] sm:$0xf]
  %v122 = vld [vmem:[%s2 + $0x17c] sm:$0xf]
  %v123 = vld [vmem:[%s1] sm:$0xff]
  %v124 = vld [vmem:[%s1 + $0x8] sm:$0xff]
  %v125 = vld [vmem:[%s1 + $0x10] sm:$0xff]
  %v126 = vld [vmem:[%s1 + $0x18] sm:$0xff]
  %128 = vset.pattern.permute.xlu0 0
  %129 = vperm.xlu0 %128, %v123
  %v130 = vpop.permute.xlu0 %129
  %133 = vset.pattern.permute.xlu0 0
  %134 = vperm.xlu0 %133, %v124
  %v135 = vpop.permute.xlu0 %134
  %138 = vset.pattern.permute.xlu0 0
  %139 = vperm.xlu0 %138, %v125
  %v140 = vpop.permute.xlu0 %139
  %143 = vset.pattern.permute.xlu0 0
  %144 = vperm.xlu0 %143, %v126
  %v145 = vpop.permute.xlu0 %144
  %v159 = vunpack.c.l.b16 %v15
  %v160 = vunpack.c.h.b16 %v15
  %v161 = vunpack.c.l.b16 %v16
  %v162 = vunpack.c.h.b16 %v16
  %v163 = vunpack.c.l.b16 %v17
  %v164 = vunpack.c.h.b16 %v17
  %v165 = vunpack.c.l.b16 %v18
  %v166 = vunpack.c.h.b16 %v18
  %v167 = vunpack.c.l.b16 %v19
  %v168 = vunpack.c.h.b16 %v19
  %v169 = vunpack.c.l.b16 %v20
  %v170 = vunpack.c.h.b16 %v20
  %v171 = vunpack.c.l.b16 %v21
  %v172 = vunpack.c.h.b16 %v21
  %v173 = vunpack.c.l.b16 %v22
  %v174 = vunpack.c.h.b16 %v22
  %v175 = vunpack.c.l.b16 %v23
  %v176 = vunpack.c.h.b16 %v23
  %v177 = vunpack.c.l.b16 %v24
  %v178 = vunpack.c.h.b16 %v24
  %v179 = vunpack.c.l.b16 %v25
  %v180 = vunpack.c.h.b16 %v25
  %v181 = vunpack.c.l.b16 %v26
  %v182 = vunpack.c.h.b16 %v26
  %v183 = vpack.c.b16 %v165, %v159
  %v184 = vpack.c.b16 %v166, %v160
  %v185 = vpack.c.b16 %v167, %v161
  %v186 = vpack.c.b16 %v168, %v162
  %v187 = vpack.c.b16 %v169, %v163
  %v188 = vpack.c.b16 %v170, %v164
  %v189 = vpack.c.b16 %v177, %v171
  %v190 = vpack.c.b16 %v178, %v172
  %v191 = vpack.c.b16 %v179, %v173
  %v192 = vpack.c.b16 %v180, %v174
  %v193 = vpack.c.b16 %v181, %v175
  %v194 = vpack.c.b16 %v182, %v176
  %v303 = vunpack.c.l.b16 %v27
  %v304 = vunpack.c.l.b16 %v28
  %v305 = vunpack.c.l.b16 %v29
  %v306 = vunpack.c.l.b16 %v30
  %v307 = vunpack.c.l.b16 %v31
  %v308 = vunpack.c.l.b16 %v32
  %v309 = vunpack.c.l.b16 %v33
  %v310 = vunpack.c.l.b16 %v34
  %v311 = vunpack.c.l.b16 %v35
  %v312 = vunpack.c.l.b16 %v36
  %v313 = vunpack.c.l.b16 %v37
  %v314 = vunpack.c.l.b16 %v38
  %v315 = vunpack.c.l.b16 %v39
  %v316 = vunpack.c.l.b16 %v40
  %v317 = vunpack.c.l.b16 %v41
  %v318 = vunpack.c.l.b16 %v42
  %v319 = vunpack.c.l.b16 %v43
  %v320 = vunpack.c.l.b16 %v44
  %v321 = vunpack.c.l.b16 %v45
  %v322 = vunpack.c.l.b16 %v46
  %v323 = vunpack.c.l.b16 %v47
  %v324 = vunpack.c.l.b16 %v48
  %v325 = vunpack.c.l.b16 %v49
  %v326 = vunpack.c.l.b16 %v50
  %v327 = vunpack.c.l.b16 %v51
  %v328 = vunpack.c.l.b16 %v52
  %v329 = vunpack.c.l.b16 %v53
  %v330 = vunpack.c.l.b16 %v54
  %v331 = vunpack.c.l.b16 %v55
  %v332 = vunpack.c.l.b16 %v56
  %v333 = vunpack.c.l.b16 %v57
  %v334 = vunpack.c.l.b16 %v58
  %v335 = vunpack.c.l.b16 %v59
  %v336 = vunpack.c.l.b16 %v60
  %v337 = vunpack.c.l.b16 %v61
  %v338 = vunpack.c.l.b16 %v62
  %v339 = vunpack.c.l.b16 %v63
  %v340 = vunpack.c.l.b16 %v64
  %v341 = vunpack.c.l.b16 %v65
  %v342 = vunpack.c.l.b16 %v66
  %v343 = vunpack.c.l.b16 %v67
  %v344 = vunpack.c.l.b16 %v68
  %v345 = vunpack.c.l.b16 %v69
  %v346 = vunpack.c.l.b16 %v70
  %v347 = vunpack.c.l.b16 %v71
  %v348 = vunpack.c.l.b16 %v72
  %v349 = vunpack.c.l.b16 %v73
  %v350 = vunpack.c.l.b16 %v74
  %v351 = vunpack.c.l.b16 %v75
  %v352 = vunpack.c.l.b16 %v76
  %v353 = vunpack.c.l.b16 %v77
  %v354 = vunpack.c.l.b16 %v78
  %v355 = vunpack.c.l.b16 %v79
  %v356 = vunpack.c.l.b16 %v80
  %v357 = vunpack.c.l.b16 %v81
  %v358 = vunpack.c.l.b16 %v82
  %v359 = vunpack.c.l.b16 %v83
  %v360 = vunpack.c.l.b16 %v84
  %v361 = vunpack.c.l.b16 %v85
  %v362 = vunpack.c.l.b16 %v86
  %v363 = vunpack.c.l.b16 %v87
  %v364 = vunpack.c.l.b16 %v88
  %v365 = vunpack.c.l.b16 %v89
  %v366 = vunpack.c.l.b16 %v90
  %v367 = vunpack.c.l.b16 %v91
  %v368 = vunpack.c.l.b16 %v92
  %v369 = vunpack.c.l.b16 %v93
  %v370 = vunpack.c.l.b16 %v94
  %v371 = vunpack.c.l.b16 %v95
  %v372 = vunpack.c.l.b16 %v96
  %v373 = vunpack.c.l.b16 %v97
  %v374 = vunpack.c.l.b16 %v98
  %v375 = vunpack.c.l.b16 %v99
  %v376 = vunpack.c.l.b16 %v100
  %v377 = vunpack.c.l.b16 %v101
  %v378 = vunpack.c.l.b16 %v102
  %v379 = vunpack.c.l.b16 %v103
  %v380 = vunpack.c.l.b16 %v104
  %v381 = vunpack.c.l.b16 %v105
  %v382 = vunpack.c.l.b16 %v106
  %v383 = vunpack.c.l.b16 %v107
  %v384 = vunpack.c.l.b16 %v108
  %v385 = vunpack.c.l.b16 %v109
  %v386 = vunpack.c.l.b16 %v110
  %v387 = vunpack.c.l.b16 %v111
  %v388 = vunpack.c.l.b16 %v112
  %v389 = vunpack.c.l.b16 %v113
  %v390 = vunpack.c.l.b16 %v114
  %v391 = vunpack.c.l.b16 %v115
  %v392 = vunpack.c.l.b16 %v116
  %v393 = vunpack.c.l.b16 %v117
  %v394 = vunpack.c.l.b16 %v118
  %v395 = vunpack.c.l.b16 %v119
  %v396 = vunpack.c.l.b16 %v120
  %v397 = vunpack.c.l.b16 %v121
  %v398 = vunpack.c.l.b16 %v122
  %v399 = vpack.c.b16 %v304, %v303
  %v400 = vpack.c.b16 %v306, %v305
  %v401 = vpack.c.b16 %v308, %v307
  %v402 = vpack.c.b16 %v310, %v309
  %v403 = vpack.c.b16 %v312, %v311
  %v404 = vpack.c.b16 %v314, %v313
  %v405 = vpack.c.b16 %v316, %v315
  %v406 = vpack.c.b16 %v318, %v317
  %v407 = vpack.c.b16 %v320, %v319
  %v408 = vpack.c.b16 %v322, %v321
  %v409 = vpack.c.b16 %v324, %v323
  %v410 = vpack.c.b16 %v326, %v325
  %v411 = vpack.c.b16 %v328, %v327
  %v412 = vpack.c.b16 %v330, %v329
  %v413 = vpack.c.b16 %v332, %v331
  %v414 = vpack.c.b16 %v334, %v333
  %v415 = vpack.c.b16 %v336, %v335
  %v416 = vpack.c.b16 %v338, %v337
  %v417 = vpack.c.b16 %v340, %v339
  %v418 = vpack.c.b16 %v342, %v341
  %v419 = vpack.c.b16 %v344, %v343
  %v420 = vpack.c.b16 %v346, %v345
  %v421 = vpack.c.b16 %v348, %v347
  %v422 = vpack.c.b16 %v350, %v349
  %v423 = vpack.c.b16 %v352, %v351
  %v424 = vpack.c.b16 %v354, %v353
  %v425 = vpack.c.b16 %v356, %v355
  %v426 = vpack.c.b16 %v358, %v357
  %v427 = vpack.c.b16 %v360, %v359
  %v428 = vpack.c.b16 %v362, %v361
  %v429 = vpack.c.b16 %v364, %v363
  %v430 = vpack.c.b16 %v366, %v365
  %v431 = vpack.c.b16 %v368, %v367
  %v432 = vpack.c.b16 %v370, %v369
  %v433 = vpack.c.b16 %v372, %v371
  %v434 = vpack.c.b16 %v374, %v373
  %v435 = vpack.c.b16 %v376, %v375
  %v436 = vpack.c.b16 %v378, %v377
  %v437 = vpack.c.b16 %v380, %v379
  %v438 = vpack.c.b16 %v382, %v381
  %v439 = vpack.c.b16 %v384, %v383
  %v440 = vpack.c.b16 %v386, %v385
  %v441 = vpack.c.b16 %v388, %v387
  %v442 = vpack.c.b16 %v390, %v389
  %v443 = vpack.c.b16 %v392, %v391
  %v444 = vpack.c.b16 %v394, %v393
  %v445 = vpack.c.b16 %v396, %v395
  %v446 = vpack.c.b16 %v398, %v397
  %495 = vmatprep.subr.bf16.mxu0 0
  %496 = vmatpush1.bf16.msra.mxu0 %v399
  %497 = vmatprep.subr.bf16.mxu0 0
  %498 = vmatpush1.bf16.msra.mxu0 %v400
  %499 = vmatprep.subr.bf16.mxu0 0
  %500 = vmatpush1.bf16.msra.mxu0 %v401
  %501 = vmatprep.subr.bf16.mxu0 0
  %502 = vmatpush1.bf16.msra.mxu0 %v402
  %503 = vmatprep.subr.bf16.mxu0 0
  %504 = vmatpush1.bf16.msra.mxu0 %v403
  %505 = vmatprep.subr.bf16.mxu0 0
  %506 = vmatpush1.bf16.msra.mxu0 %v404
  %507 = vmatprep.subr.bf16.mxu0 0
  %508 = vmatpush1.bf16.msra.mxu0 %v405
  %509 = vmatprep.subr.bf16.mxu0 0
  %510 = vmatpush1.bf16.msra.mxu0 %v406
  %511 = vmatprep.subr.bf16.mxu0 0
  %512 = vmatpush1.bf16.msra.mxu0 %v407
  %513 = vmatprep.subr.bf16.mxu0 0
  %514 = vmatpush1.bf16.msra.mxu0 %v408
  %515 = vmatprep.subr.bf16.mxu0 0
  %516 = vmatpush1.bf16.msra.mxu0 %v409
  %517 = vmatprep.subr.bf16.mxu0 0
  %518 = vmatpush1.bf16.msra.mxu0 %v410
  %519 = vmatprep.subr.bf16.mxu0 0
  %520 = vmatpush1.bf16.msra.mxu0 %v411
  %521 = vmatprep.subr.bf16.mxu0 0
  %522 = vmatpush1.bf16.msra.mxu0 %v412
  %523 = vmatprep.subr.bf16.mxu0 0
  %524 = vmatpush1.bf16.msra.mxu0 %v413
  %525 = vmatprep.subr.bf16.mxu0 0
  %526 = vmatpush1.bf16.msra.mxu0 %v414
  %527 = vmatprep.mubr.bf16.mxu0 %v184
  %528 = vmatmul.mubr.bf16.gmra.mrb[0].mxu0 %v183
  %v529 = vpop.f32.mrb[0].mxu0
  %v530 = vadd.f32 %v130, %v529
  %v531 = vpop.f32.mrb[0].mxu0
  %v532 = vpop.f32.mrb[0].mxu0
  %v533 = vadd.f32 %v135, %v532
  %v534 = vpop.f32.mrb[0].mxu0
  %535 = vmatprep.mubr.bf16.mxu0 %v190
  %536 = vmatmul.mubr.bf16.gmra.mrb[0].mxu0 %v189
  %v537 = vpop.f32.mrb[0].mxu0
  %v538 = vadd.f32 %v140, %v537
  %v539 = vpop.f32.mrb[0].mxu0
  %v540 = vpop.f32.mrb[0].mxu0
  %v541 = vadd.f32 %v145, %v540
  %v542 = vpop.f32.mrb[0].mxu0
  %543 = vdwg.mxu0
  %544 = vmatprep.subr.bf16.mxu0 0
  %545 = vmatpush1.bf16.msra.mxu0 %v415
  %546 = vmatprep.subr.bf16.mxu0 0
  %547 = vmatpush1.bf16.msra.mxu0 %v416
  %548 = vmatprep.subr.bf16.mxu0 0
  %549 = vmatpush1.bf16.msra.mxu0 %v417
  %550 = vmatprep.subr.bf16.mxu0 0
  %551 = vmatpush1.bf16.msra.mxu0 %v418
  %552 = vmatprep.subr.bf16.mxu0 0
  %553 = vmatpush1.bf16.msra.mxu0 %v419
  %554 = vmatprep.subr.bf16.mxu0 0
  %555 = vmatpush1.bf16.msra.mxu0 %v420
  %556 = vmatprep.subr.bf16.mxu0 0
  %557 = vmatpush1.bf16.msra.mxu0 %v421
  %558 = vmatprep.subr.bf16.mxu0 0
  %559 = vmatpush1.bf16.msra.mxu0 %v422
  %560 = vmatprep.subr.bf16.mxu0 0
  %561 = vmatpush1.bf16.msra.mxu0 %v423
  %562 = vmatprep.subr.bf16.mxu0 0
  %563 = vmatpush1.bf16.msra.mxu0 %v424
  %564 = vmatprep.subr.bf16.mxu0 0
  %565 = vmatpush1.bf16.msra.mxu0 %v425
  %566 = vmatprep.subr.bf16.mxu0 0
  %567 = vmatpush1.bf16.msra.mxu0 %v426
  %568 = vmatprep.subr.bf16.mxu0 0
  %569 = vmatpush1.bf16.msra.mxu0 %v427
  %570 = vmatprep.subr.bf16.mxu0 0
  %571 = vmatpush1.bf16.msra.mxu0 %v428
  %572 = vmatprep.subr.bf16.mxu0 0
  %573 = vmatpush1.bf16.msra.mxu0 %v429
  %574 = vmatprep.subr.bf16.mxu0 0
  %575 = vmatpush1.bf16.msra.mxu0 %v430
  %576 = vmatprep.mubr.bf16.mxu0 %v186
  %577 = vmatmul.mubr.bf16.gmra.mrb[0].mxu0 %v185
  %v578 = vpop.f32.mrb[0].mxu0
  %v579 = vadd.f32 %v530, %v578
  %v580 = vpop.f32.mrb[0].mxu0
  %v581 = vpop.f32.mrb[0].mxu0
  %v582 = vadd.f32 %v533, %v581
  %v583 = vpop.f32.mrb[0].mxu0
  %584 = vmatprep.mubr.bf16.mxu0 %v192
  %585 = vmatmul.mubr.bf16.gmra.mrb[0].mxu0 %v191
  %v586 = vpop.f32.mrb[0].mxu0
  %v587 = vadd.f32 %v538, %v586
  %v588 = vpop.f32.mrb[0].mxu0
  %v589 = vpop.f32.mrb[0].mxu0
  %v590 = vadd.f32 %v541, %v589
  %v591 = vpop.f32.mrb[0].mxu0
  %592 = vdwg.mxu0
  %593 = vmatprep.subr.bf16.mxu0 0
  %594 = vmatpush1.bf16.msra.mxu0 %v431
  %595 = vmatprep.subr.bf16.mxu0 0
  %596 = vmatpush1.bf16.msra.mxu0 %v432
  %597 = vmatprep.subr.bf16.mxu0 0
  %598 = vmatpush1.bf16.msra.mxu0 %v433
  %599 = vmatprep.subr.bf16.mxu0 0
  %600 = vmatpush1.bf16.msra.mxu0 %v434
  %601 = vmatprep.subr.bf16.mxu0 0
  %602 = vmatpush1.bf16.msra.mxu0 %v435
  %603 = vmatprep.subr.bf16.mxu0 0
  %604 = vmatpush1.bf16.msra.mxu0 %v436
  %605 = vmatprep.subr.bf16.mxu0 0
  %606 = vmatpush1.bf16.msra.mxu0 %v437
  %607 = vmatprep.subr.bf16.mxu0 0
  %608 = vmatpush1.bf16.msra.mxu0 %v438
  %609 = vmatprep.subr.bf16.mxu0 0
  %610 = vmatpush1.bf16.msra.mxu0 %v439
  %611 = vmatprep.subr.bf16.mxu0 0
  %612 = vmatpush1.bf16.msra.mxu0 %v440
  %613 = vmatprep.subr.bf16.mxu0 0
  %614 = vmatpush1.bf16.msra.mxu0 %v441
  %615 = vmatprep.subr.bf16.mxu0 0
  %616 = vmatpush1.bf16.msra.mxu0 %v442
  %617 = vmatprep.subr.bf16.mxu0 0
  %618 = vmatpush1.bf16.msra.mxu0 %v443
  %619 = vmatprep.subr.bf16.mxu0 0
  %620 = vmatpush1.bf16.msra.mxu0 %v444
  %621 = vmatprep.subr.bf16.mxu0 0
  %622 = vmatpush1.bf16.msra.mxu0 %v445
  %623 = vmatprep.subr.bf16.mxu0 0
  %624 = vmatpush1.bf16.msra.mxu0 %v446
  %625 = vmatprep.mubr.bf16.mxu0 %v188
  %626 = vmatmul.mubr.bf16.gmra.mrb[0].mxu0 %v187
  %v627 = vpop.f32.mrb[0].mxu0
  %v628 = vadd.f32 %v579, %v627
  %v629 = vpop.f32.mrb[0].mxu0
  %v630 = vpop.f32.mrb[0].mxu0
  %v631 = vadd.f32 %v582, %v630
  %v632 = vpop.f32.mrb[0].mxu0
  %633 = vmatprep.mubr.bf16.mxu0 %v194
  %634 = vmatmul.mubr.bf16.gmra.mrb[0].mxu0 %v193
  %v635 = vpop.f32.mrb[0].mxu0
  %v636 = vadd.f32 %v587, %v635
  %v637 = vpop.f32.mrb[0].mxu0
  %v638 = vpop.f32.mrb[0].mxu0
  %v639 = vadd.f32 %v590, %v638
  %v640 = vpop.f32.mrb[0].mxu0
  %641 = vdwg.mxu0
  %v642 = vmax.f32 %v628, 0.0
  %v643 = vmax.f32 %v631, 0.0
  %v644 = vmax.f32 %v636, 0.0
  %v645 = vmax.f32 %v639, 0.0
  %v646 = vpack.c.bf16 %v643, %v642
  %v647 = vpack.c.bf16 %v645, %v644
  %v650 = vunpack.c.l.b16 %v646
  %v651 = vunpack.c.h.b16 %v646
  %v652 = vunpack.c.l.b16 %v647
  %v653 = vunpack.c.h.b16 %v647
  %v654 = vpack.c.b16 %v650, %v650
  %v655 = vpack.c.b16 %v651, %v651
  %v656 = vpack.c.b16 %v652, %v652
  %v657 = vpack.c.b16 %v653, %v653
  %662 = vst [vmem:[%s3] sm:$0xf] %v654
  %663 = vst [vmem:[%s3 + $0x4] sm:$0xf] %v655
  %664 = vst [vmem:[%s3 + $0x8] sm:$0xf] %v656
  %665 = vst [vmem:[%s3 + $0xc] sm:$0xf] %v657
  // Predicated region
  $region14: #{actor_forward.2} parent=0 // pred_check
    _
  $region15: #{actor_forward.2} parent=0 // pred_check_branch
    %667 = sbr.rel (0) target = $region17
  $region16: #{actor_forward.2} parent=0 // pred_region
    _
  $region17: #{actor_forward.2} parent=0 // pred_fallthru
    _
  // Predicated region
  $region18: #{actor_forward.2} parent=0 // pred_check
    _
  $region19: #{actor_forward.2} parent=0 // pred_check_branch
    %669 = sbr.rel (0) target = $region21
  $region20: #{actor_forward.2} parent=0 // pred_region
    _
  $region21: #{actor_forward.2} parent=0 // pred_fallthru
    _

// kernel: actor_forward.3
$region0: #{actor_forward.3}
  #allocation0 [shape = 'u32[]', space=smem, size = 0x4, offset = 0x4, fixed_abs, tag = 'smem constant byte address 0x4 - core index']
  #allocation1 [shape = 'u32[144,128]{1,0:T(1,128)}', space=vmem, size = 0x12000, scoped, tag = 'internal scratch']
  #allocation2 [shape = 'bf16[2,9,64]{2,1,0:T(8,128)(2,1)}', space=vmem, size = 0x2000, scoped, tag = 'scratch operand']
  %s0 = inlined_call_operand.vmem [shape: bf16[18,512], index: 0, kind: input, shape index: {}]
  %s1 = inlined_call_operand.vmem [shape: bf16[512,64], index: 1, kind: input, shape index: {}]
  %s2 = inlined_call_operand.vmem [shape: f32[1,64], index: 2, kind: input, shape index: {}]
  %s3 = inlined_call_operand.vmem [shape: bf16[9,64,64], index: 3, kind: input, shape index: {}]
  %s4 = inlined_call_operand.vmem [shape: f32[1,64], index: 4, kind: input, shape index: {}]
  %s5 = inlined_call_operand.vmem [shape: bf16[1,64,512], index: 5, kind: input, shape index: {}]
  %s6 = inlined_call_operand.vmem [shape: f32[1,512], index: 6, kind: input, shape index: {}]
  %s7 = inlined_call_operand.vmem [shape: bf16[512,128], index: 7, kind: input, shape index: {}]
  %s8 = inlined_call_operand.vmem [shape: f32[1,128], index: 8, kind: input, shape index: {}]
  %s9 = inlined_call_operand.vmem [shape: f32[2,128], index: 9, kind: output, shape index: {}]
  %s10 = sld [smem:[#allocation0]]
  $region46: #{actor_forward.3} parent=0
    _
  %s12 = ssub.s32 1, %s10
  %s13 = scalar_select 0, %s12, %s10
  // Predicated region
  $region2: #{actor_forward.3} parent=0 // pred_check
    _
  $region3: #{actor_forward.3} parent=0 // pred_check_branch
    %15 = sbr.rel (0) target = $region5
  $region4: #{actor_forward.3} parent=0 // pred_region
    _
  $region5: #{actor_forward.3} parent=0 // pred_fallthru
    _
  // Predicated region
  $region6: #{actor_forward.3} parent=0 // pred_check
    _
  $region7: #{actor_forward.3} parent=0 // pred_check_branch
    %17 = sbr.rel (0) target = $region9
  $region8: #{actor_forward.3} parent=0 // pred_region
    _
  $region9: #{actor_forward.3} parent=0 // pred_fallthru
    _
  // Predicated region
  $region10: #{actor_forward.3} parent=0 // pred_check
    _
  $region11: #{actor_forward.3} parent=0 // pred_check_branch
    %19 = sbr.rel (0) target = $region13
  $region12: #{actor_forward.3} parent=0 // pred_region
    _
  $region13: #{actor_forward.3} parent=0 // pred_fallthru
    _
  // Predicated region
  $region14: #{actor_forward.3} parent=0 // pred_check
    _
  $region15: #{actor_forward.3} parent=0 // pred_check_branch
    %21 = sbr.rel (0) target = $region17
  $region16: #{actor_forward.3} parent=0 // pred_region
    _
  $region17: #{actor_forward.3} parent=0 // pred_fallthru
    _
  // Predicated region
  $region18: #{actor_forward.3} parent=0 // pred_check
    _
  $region19: #{actor_forward.3} parent=0 // pred_check_branch
    %23 = sbr.rel (0) target = $region21
  $region20: #{actor_forward.3} parent=0 // pred_region
    _
  $region21: #{actor_forward.3} parent=0 // pred_fallthru
    _
  // Predicated region
  $region22: #{actor_forward.3} parent=0 // pred_check
    _
  $region23: #{actor_forward.3} parent=0 // pred_check_branch
    %25 = sbr.rel (0) target = $region25
  $region24: #{actor_forward.3} parent=0 // pred_region
    _
  $region25: #{actor_forward.3} parent=0 // pred_fallthru
    _
  // Predicated region
  $region26: #{actor_forward.3} parent=0 // pred_check
    _
  $region27: #{actor_forward.3} parent=0 // pred_check_branch
    %27 = sbr.rel (0) target = $region29
  $region28: #{actor_forward.3} parent=0 // pred_region
    _
  $region29: #{actor_forward.3} parent=0 // pred_fallthru
    _
  // Predicated region
  $region30: #{actor_forward.3} parent=0 // pred_check
    _
  $region31: #{actor_forward.3} parent=0 // pred_check_branch
    %29 = sbr.rel (0) target = $region33
  $region32: #{actor_forward.3} parent=0 // pred_region
    _
  $region33: #{actor_forward.3} parent=0 // pred_fallthru
    _
  // Predicated region
  $region34: #{actor_forward.3} parent=0 // pred_check
    _
  $region35: #{actor_forward.3} parent=0 // pred_check_branch
    %31 = sbr.rel (0) target = $region37
  $region36: #{actor_forward.3} parent=0 // pred_region
    _
  $region37: #{actor_forward.3} parent=0 // pred_fallthru
    _
  %v33 = vld [vmem:[%s0] sm:$0xff]
  %v34 = vld [vmem:[%s0 + $0x8] sm:$0xff]
  %v35 = vld [vmem:[%s0 + $0x10] sm:$0xff]
  %v36 = vld [vmem:[%s0 + $0x18] sm:$0xff]
  %v37 = vld [vmem:[%s0 + $0x20] sm:$0x11]
  %v38 = vld [vmem:[%s0 + $0x28] sm:$0x11]
  %v39 = vld [vmem:[%s1] sm:$0xf]
  %v40 = vld [vmem:[%s1 + $0x4] sm:$0xf]
  %v41 = vld [vmem:[%s1 + $0x8] sm:$0xf]
  %v42 = vld [vmem:[%s1 + $0xc] sm:$0xf]
  %v43 = vld [vmem:[%s1 + $0x10] sm:$0xf]
  %v44 = vld [vmem:[%s1 + $0x14] sm:$0xf]
  %v45 = vld [vmem:[%s1 + $0x18] sm:$0xf]
  %v46 = vld [vmem:[%s1 + $0x1c] sm:$0xf]
  %v47 = vld [vmem:[%s1 + $0x20] sm:$0xf]
  %v48 = vld [vmem:[%s1 + $0x24] sm:$0xf]
  %v49 = vld [vmem:[%s1 + $0x28] sm:$0xf]
  %v50 = vld [vmem:[%s1 + $0x2c] sm:$0xf]
  %v51 = vld [vmem:[%s1 + $0x30] sm:$0xf]
  %v52 = vld [vmem:[%s1 + $0x34] sm:$0xf]
  %v53 = vld [vmem:[%s1 + $0x38] sm:$0xf]
  %v54 = vld [vmem:[%s1 + $0x3c] sm:$0xf]
  %v55 = vld [vmem:[%s1 + $0x40] sm:$0xf]
  %v56 = vld [vmem:[%s1 + $0x44] sm:$0xf]
  %v57 = vld [vmem:[%s1 + $0x48] sm:$0xf]
  %v58 = vld [vmem:[%s1 + $0x4c] sm:$0xf]
  %v59 = vld [vmem:[%s1 + $0x50] sm:$0xf]
  %v60 = vld [vmem:[%s1 + $0x54] sm:$0xf]
  %v61 = vld [vmem:[%s1 + $0x58] sm:$0xf]
  %v62 = vld [vmem:[%s1 + $0x5c] sm:$0xf]
  %v63 = vld [vmem:[%s1 + $0x60] sm:$0xf]
  %v64 = vld [vmem:[%s1 + $0x64] sm:$0xf]
  %v65 = vld [vmem:[%s1 + $0x68] sm:$0xf]
  %v66 = vld [vmem:[%s1 + $0x6c] sm:$0xf]
  %v67 = vld [vmem:[%s1 + $0x70] sm:$0xf]
  %v68 = vld [vmem:[%s1 + $0x74] sm:$0xf]
  %v69 = vld [vmem:[%s1 + $0x78] sm:$0xf]
  %v70 = vld [vmem:[%s1 + $0x7c] sm:$0xf]
  %v71 = vld [vmem:[%s1 + $0x80] sm:$0xf]
  %v72 = vld [vmem:[%s1 + $0x84] sm:$0xf]
  %v73 = vld [vmem:[%s1 + $0x88] sm:$0xf]
  %v74 = vld [vmem:[%s1 + $0x8c] sm:$0xf]
  %v75 = vld [vmem:[%s1 + $0x90] sm:$0xf]
  %v76 = vld [vmem:[%s1 + $0x94] sm:$0xf]
  %v77 = vld [vmem:[%s1 + $0x98] sm:$0xf]
  %v78 = vld [vmem:[%s1 + $0x9c] sm:$0xf]
  %v79 = vld [vmem:[%s1 + $0xa0] sm:$0xf]
  %v80 = vld [vmem:[%s1 + $0xa4] sm:$0xf]
  %v81 = vld [vmem:[%s1 + $0xa8] sm:$0xf]
  %v82 = vld [vmem:[%s1 + $0xac] sm:$0xf]
  %v83 = vld [vmem:[%s1 + $0xb0] sm:$0xf]
  %v84 = vld [vmem:[%s1 + $0xb4] sm:$0xf]
  %v85 = vld [vmem:[%s1 + $0xb8] sm:$0xf]
  %v86 = vld [vmem:[%s1 + $0xbc] sm:$0xf]
  %v87 = vld [vmem:[%s1 + $0xc0] sm:$0xf]
  %v88 = vld [vmem:[%s1 + $0xc4] sm:$0xf]
  %v89 = vld [vmem:[%s1 + $0xc8] sm:$0xf]
  %v90 = vld [vmem:[%s1 + $0xcc] sm:$0xf]
  %v91 = vld [vmem:[%s1 + $0xd0] sm:$0xf]
  %v92 = vld [vmem:[%s1 + $0xd4] sm:$0xf]
  %v93 = vld [vmem:[%s1 + $0xd8] sm:$0xf]
  %v94 = vld [vmem:[%s1 + $0xdc] sm:$0xf]
  %v95 = vld [vmem:[%s1 + $0xe0] sm:$0xf]
  %v96 = vld [vmem:[%s1 + $0xe4] sm:$0xf]
  %v97 = vld [vmem:[%s1 + $0xe8] sm:$0xf]
  %v98 = vld [vmem:[%s1 + $0xec] sm:$0xf]
  %v99 = vld [vmem:[%s1 + $0xf0] sm:$0xf]
  %v100 = vld [vmem:[%s1 + $0xf4] sm:$0xf]
  %v101 = vld [vmem:[%s1 + $0xf8] sm:$0xf]
  %v102 = vld [vmem:[%s1 + $0xfc] sm:$0xf]
  %v103 = vld [vmem:[%s2] sm:$0x1]
  %v105 = vlaneseq
  %v106 = vshrl.u32 %v105, 7
  %v107 = vsub.s32 0, %v106
  %v108 = vrot.slane %v103, %v107
  %v116 = vunpack.c.l.b16 %v33
  %v117 = vunpack.c.h.b16 %v33
  %v118 = vunpack.c.l.b16 %v34
  %v119 = vunpack.c.h.b16 %v34
  %v120 = vunpack.c.l.b16 %v35
  %v121 = vunpack.c.h.b16 %v35
  %v122 = vunpack.c.l.b16 %v36
  %v123 = vunpack.c.h.b16 %v36
  %v124 = vunpack.c.l.b16 %v37
  %v125 = vunpack.c.h.b16 %v37
  %v126 = vunpack.c.l.b16 %v38
  %v127 = vunpack.c.h.b16 %v38
  %v128 = vpack.c.b16 %v120, %v116
  %v129 = vpack.c.b16 %v121, %v117
  %v130 = vpack.c.b16 %v122, %v118
  %v131 = vpack.c.b16 %v123, %v119
  %v132 = vpack.c.b16 %v124, %v124
  %v133 = vpack.c.b16 %v125, %v125
  %v134 = vpack.c.b16 %v126, %v126
  %v135 = vpack.c.b16 %v127, %v127
  %v208 = vunpack.c.l.b16 %v39
  %v209 = vunpack.c.l.b16 %v40
  %v210 = vunpack.c.l.b16 %v41
  %v211 = vunpack.c.l.b16 %v42
  %v212 = vunpack.c.l.b16 %v43
  %v213 = vunpack.c.l.b16 %v44
  %v214 = vunpack.c.l.b16 %v45
  %v215 = vunpack.c.l.b16 %v46
  %v216 = vunpack.c.l.b16 %v47
  %v217 = vunpack.c.l.b16 %v48
  %v218 = vunpack.c.l.b16 %v49
  %v219 = vunpack.c.l.b16 %v50
  %v220 = vunpack.c.l.b16 %v51
  %v221 = vunpack.c.l.b16 %v52
  %v222 = vunpack.c.l.b16 %v53
  %v223 = vunpack.c.l.b16 %v54
  %v224 = vunpack.c.l.b16 %v55
  %v225 = vunpack.c.l.b16 %v56
  %v226 = vunpack.c.l.b16 %v57
  %v227 = vunpack.c.l.b16 %v58
  %v228 = vunpack.c.l.b16 %v59
  %v229 = vunpack.c.l.b16 %v60
  %v230 = vunpack.c.l.b16 %v61
  %v231 = vunpack.c.l.b16 %v62
  %v232 = vunpack.c.l.b16 %v63
  %v233 = vunpack.c.l.b16 %v64
  %v234 = vunpack.c.l.b16 %v65
  %v235 = vunpack.c.l.b16 %v66
  %v236 = vunpack.c.l.b16 %v67
  %v237 = vunpack.c.l.b16 %v68
  %v238 = vunpack.c.l.b16 %v69
  %v239 = vunpack.c.l.b16 %v70
  %v240 = vunpack.c.l.b16 %v71
  %v241 = vunpack.c.l.b16 %v72
  %v242 = vunpack.c.l.b16 %v73
  %v243 = vunpack.c.l.b16 %v74
  %v244 = vunpack.c.l.b16 %v75
  %v245 = vunpack.c.l.b16 %v76
  %v246 = vunpack.c.l.b16 %v77
  %v247 = vunpack.c.l.b16 %v78
  %v248 = vunpack.c.l.b16 %v79
  %v249 = vunpack.c.l.b16 %v80
  %v250 = vunpack.c.l.b16 %v81
  %v251 = vunpack.c.l.b16 %v82
  %v252 = vunpack.c.l.b16 %v83
  %v253 = vunpack.c.l.b16 %v84
  %v254 = vunpack.c.l.b16 %v85
  %v255 = vunpack.c.l.b16 %v86
  %v256 = vunpack.c.l.b16 %v87
  %v257 = vunpack.c.l.b16 %v88
  %v258 = vunpack.c.l.b16 %v89
  %v259 = vunpack.c.l.b16 %v90
  %v260 = vunpack.c.l.b16 %v91
  %v261 = vunpack.c.l.b16 %v92
  %v262 = vunpack.c.l.b16 %v93
  %v263 = vunpack.c.l.b16 %v94
  %v264 = vunpack.c.l.b16 %v95
  %v265 = vunpack.c.l.b16 %v96
  %v266 = vunpack.c.l.b16 %v97
  %v267 = vunpack.c.l.b16 %v98
  %v268 = vunpack.c.l.b16 %v99
  %v269 = vunpack.c.l.b16 %v100
  %v270 = vunpack.c.l.b16 %v101
  %v271 = vunpack.c.l.b16 %v102
  %v272 = vpack.c.b16 %v209, %v208
  %v273 = vpack.c.b16 %v211, %v210
  %v274 = vpack.c.b16 %v213, %v212
  %v275 = vpack.c.b16 %v215, %v214
  %v276 = vpack.c.b16 %v217, %v216
  %v277 = vpack.c.b16 %v219, %v218
  %v278 = vpack.c.b16 %v221, %v220
  %v279 = vpack.c.b16 %v223, %v222
  %v280 = vpack.c.b16 %v225, %v224
  %v281 = vpack.c.b16 %v227, %v226
  %v282 = vpack.c.b16 %v229, %v228
  %v283 = vpack.c.b16 %v231, %v230
  %v284 = vpack.c.b16 %v233, %v232
  %v285 = vpack.c.b16 %v235, %v234
  %v286 = vpack.c.b16 %v237, %v236
  %v287 = vpack.c.b16 %v239, %v238
  %v288 = vpack.c.b16 %v241, %v240
  %v289 = vpack.c.b16 %v243, %v242
  %v290 = vpack.c.b16 %v245, %v244
  %v291 = vpack.c.b16 %v247, %v246
  %v292 = vpack.c.b16 %v249, %v248
  %v293 = vpack.c.b16 %v251, %v250
  %v294 = vpack.c.b16 %v253, %v252
  %v295 = vpack.c.b16 %v255, %v254
  %v296 = vpack.c.b16 %v257, %v256
  %v297 = vpack.c.b16 %v259, %v258
  %v298 = vpack.c.b16 %v261, %v260
  %v299 = vpack.c.b16 %v263, %v262
  %v300 = vpack.c.b16 %v265, %v264
  %v301 = vpack.c.b16 %v267, %v266
  %v302 = vpack.c.b16 %v269, %v268
  %v303 = vpack.c.b16 %v271, %v270
  %336 = vmatprep.subr.bf16.mxu0 0
  %337 = vmatpush1.bf16.msra.mxu0 %v272
  %338 = vmatprep.subr.bf16.mxu0 0
  %339 = vmatpush1.bf16.msra.mxu0 %v273
  %340 = vmatprep.subr.bf16.mxu0 0
  %341 = vmatpush1.bf16.msra.mxu0 %v274
  %342 = vmatprep.subr.bf16.mxu0 0
  %343 = vmatpush1.bf16.msra.mxu0 %v275
  %344 = vmatprep.subr.bf16.mxu0 0
  %345 = vmatpush1.bf16.msra.mxu0 %v276
  %346 = vmatprep.subr.bf16.mxu0 0
  %347 = vmatpush1.bf16.msra.mxu0 %v277
  %348 = vmatprep.subr.bf16.mxu0 0
  %349 = vmatpush1.bf16.msra.mxu0 %v278
  %350 = vmatprep.subr.bf16.mxu0 0
  %351 = vmatpush1.bf16.msra.mxu0 %v279
  %352 = vmatprep.subr.bf16.mxu0 0
  %353 = vmatpush1.bf16.msra.mxu0 %v280
  %354 = vmatprep.subr.bf16.mxu0 0
  %355 = vmatpush1.bf16.msra.mxu0 %v281
  %356 = vmatprep.subr.bf16.mxu0 0
  %357 = vmatpush1.bf16.msra.mxu0 %v282
  %358 = vmatprep.subr.bf16.mxu0 0
  %359 = vmatpush1.bf16.msra.mxu0 %v283
  %360 = vmatprep.subr.bf16.mxu0 0
  %361 = vmatpush1.bf16.msra.mxu0 %v284
  %362 = vmatprep.subr.bf16.mxu0 0
  %363 = vmatpush1.bf16.msra.mxu0 %v285
  %364 = vmatprep.subr.bf16.mxu0 0
  %365 = vmatpush1.bf16.msra.mxu0 %v286
  %366 = vmatprep.subr.bf16.mxu0 0
  %367 = vmatpush1.bf16.msra.mxu0 %v287
  %368 = vmatprep.mubr.bf16.mxu0 %v129
  %369 = vmatmul.mubr.bf16.gmra.mrb[0].mxu0 %v128
  %v370 = vpop.f32.mrb[0].mxu0
  %v371 = vadd.f32 %v108, %v370
  %v372 = vpop.f32.mrb[0].mxu0
  %v373 = vpop.f32.mrb[0].mxu0
  %v374 = vadd.f32 %v108, %v373
  %v375 = vpop.f32.mrb[0].mxu0
  %376 = vmatprep.mubr.bf16.mxu0 %v133
  %377 = vmatmul.mubr.bf16.gmra.mrb[0].mxu0 %v132
  %v378 = vpop.f32.mrb[0].mxu0
  %v379 = vadd.f32 %v108, %v378
  %v380 = vpop.f32.mrb[0].mxu0
  %v381 = vpop.f32.mrb[0].mxu0
  %v382 = vpop.f32.mrb[0].mxu0
  %383 = vdwg.mxu0
  %384 = vmatprep.subr.bf16.mxu0 0
  %385 = vmatpush1.bf16.msra.mxu0 %v288
  %386 = vmatprep.subr.bf16.mxu0 0
  %387 = vmatpush1.bf16.msra.mxu0 %v289
  %388 = vmatprep.subr.bf16.mxu0 0
  %389 = vmatpush1.bf16.msra.mxu0 %v290
  %390 = vmatprep.subr.bf16.mxu0 0
  %391 = vmatpush1.bf16.msra.mxu0 %v291
  %392 = vmatprep.subr.bf16.mxu0 0
  %393 = vmatpush1.bf16.msra.mxu0 %v292
  %394 = vmatprep.subr.bf16.mxu0 0
  %395 = vmatpush1.bf16.msra.mxu0 %v293
  %396 = vmatprep.subr.bf16.mxu0 0
  %397 = vmatpush1.bf16.msra.mxu0 %v294
  %398 = vmatprep.subr.bf16.mxu0 0
  %399 = vmatpush1.bf16.msra.mxu0 %v295
  %400 = vmatprep.subr.bf16.mxu0 0
  %401 = vmatpush1.bf16.msra.mxu0 %v296
  %402 = vmatprep.subr.bf16.mxu0 0
  %403 = vmatpush1.bf16.msra.mxu0 %v297
  %404 = vmatprep.subr.bf16.mxu0 0
  %405 = vmatpush1.bf16.msra.mxu0 %v298
  %406 = vmatprep.subr.bf16.mxu0 0
  %407 = vmatpush1.bf16.msra.mxu0 %v299
  %408 = vmatprep.subr.bf16.mxu0 0
  %409 = vmatpush1.bf16.msra.mxu0 %v300
  %410 = vmatprep.subr.bf16.mxu0 0
  %411 = vmatpush1.bf16.msra.mxu0 %v301
  %412 = vmatprep.subr.bf16.mxu0 0
  %413 = vmatpush1.bf16.msra.mxu0 %v302
  %414 = vmatprep.subr.bf16.mxu0 0
  %415 = vmatpush1.bf16.msra.mxu0 %v303
  %416 = vmatprep.mubr.bf16.mxu0 %v131
  %417 = vmatmul.mubr.bf16.gmra.mrb[0].mxu0 %v130
  %v418 = vpop.f32.mrb[0].mxu0
  %v419 = vadd.f32 %v371, %v418
  %v420 = vpop.f32.mrb[0].mxu0
  %v421 = vpop.f32.mrb[0].mxu0
  %v422 = vadd.f32 %v374, %v421
  %v423 = vpop.f32.mrb[0].mxu0
  %424 = vmatprep.mubr.bf16.mxu0 %v135
  %425 = vmatmul.mubr.bf16.gmra.mrb[0].mxu0 %v134
  %v426 = vpop.f32.mrb[0].mxu0
  %v427 = vadd.f32 %v379, %v426
  %v428 = vpop.f32.mrb[0].mxu0
  %v429 = vpop.f32.mrb[0].mxu0
  %v430 = vpop.f32.mrb[0].mxu0
  %431 = vdwg.mxu0
  %v432 = vmax.f32 %v419, 0.0
  %v433 = vmax.f32 %v422, 0.0
  %v434 = vmax.f32 %v427, 0.0
  %v435 = vpack.c.bf16 %v433, %v432
  %v436 = vpack.c.bf16 %v434, %v434
  %v437 = vld [vmem:[%s3] sm:$0xf]
  %v438 = vld [vmem:[%s3 + $0x4] sm:$0xf]
  %v439 = vld [vmem:[%s3 + $0x8] sm:$0xf]
  %v440 = vld [vmem:[%s3 + $0xc] sm:$0xf]
  %v441 = vld [vmem:[%s3 + $0x10] sm:$0xf]
  %v442 = vld [vmem:[%s3 + $0x14] sm:$0xf]
  %v443 = vld [vmem:[%s3 + $0x18] sm:$0xf]
  %v444 = vld [vmem:[%s3 + $0x1c] sm:$0xf]
  %s445 = scalar_lea.vmem %s3, 32
  %v446 = vld [vmem:[%s445] sm:$0xf]
  %v447 = vld [vmem:[%s445 + $0x4] sm:$0xf]
  %v448 = vld [vmem:[%s445 + $0x8] sm:$0xf]
  %v449 = vld [vmem:[%s445 + $0xc] sm:$0xf]
  %v450 = vld [vmem:[%s445 + $0x10] sm:$0xf]
  %v451 = vld [vmem:[%s445 + $0x14] sm:$0xf]
  %v452 = vld [vmem:[%s445 + $0x18] sm:$0xf]
  %v453 = vld [vmem:[%s445 + $0x1c] sm:$0xf]
  %v455 = vshrl.u32 %v435, 16
  %v457 = vshll.u32 %v435, 16
  %v459 = vrot.slane %v457, 1
  %v460 = vor.u32 %v455, %v459
  %v469 = vunpack.c.l.b16 %v446
  %v470 = vunpack.c.l.b16 %v447
  %v471 = vunpack.c.l.b16 %v448
  %v472 = vunpack.c.l.b16 %v449
  %v473 = vunpack.c.l.b16 %v450
  %v474 = vunpack.c.l.b16 %v451
  %v475 = vunpack.c.l.b16 %v452
  %v476 = vunpack.c.l.b16 %v453
  %v477 = vpack.c.b16 %v470, %v469
  %v478 = vpack.c.b16 %v472, %v471
  %v479 = vpack.c.b16 %v474, %v473
  %v480 = vpack.c.b16 %v476, %v475
  %vm485 = vcmask 523264
  %v487 = vsel %vm485, %v460, 0
  %489 = vmatprep.subr.bf16.mxu0 0
  %490 = vmatpush1.bf16.msra.mxu0 %v477
  %491 = vmatprep.subr.bf16.mxu0 0
  %492 = vmatpush1.bf16.msra.mxu0 %v478
  %493 = vmatprep.subr.bf16.mxu0 0
  %494 = vmatpush1.bf16.msra.mxu0 %v479
  %495 = vmatprep.subr.bf16.mxu0 0
  %496 = vmatpush1.bf16.msra.mxu0 %v480
  %497 = vmatprep.subr.bf16.mxu0 0
  %498 = vmatpush1.bf16.msra.mxu0 0
  %499 = vmatprep.subr.bf16.mxu0 0
  %500 = vmatpush1.bf16.msra.mxu0 0
  %501 = vmatprep.subr.bf16.mxu0 0
  %502 = vmatpush1.bf16.msra.mxu0 0
  %503 = vmatprep.subr.bf16.mxu0 0
  %504 = vmatpush1.bf16.msra.mxu0 0
  %505 = vmatprep.subr.bf16.mxu0 0
  %506 = vmatpush1.bf16.msra.mxu0 0
  %507 = vmatprep.subr.bf16.mxu0 0
  %508 = vmatpush1.bf16.msra.mxu0 0
  %509 = vmatprep.subr.bf16.mxu0 0
  %510 = vmatpush1.bf16.msra.mxu0 0
  %511 = vmatprep.subr.bf16.mxu0 0
  %512 = vmatpush1.bf16.msra.mxu0 0
  %513 = vmatprep.subr.bf16.mxu0 0
  %514 = vmatpush1.bf16.msra.mxu0 0
  %515 = vmatprep.subr.bf16.mxu0 0
  %516 = vmatpush1.bf16.msra.mxu0 0
  %517 = vmatprep.subr.bf16.mxu0 0
  %518 = vmatpush1.bf16.msra.mxu0 0
  %519 = vmatprep.subr.bf16.mxu0 0
  %520 = vmatpush1.bf16.msra.mxu0 0
  %521 = vmatprep.mubr.bf16.mxu0 0
  %522 = vmatmul.mubr.bf16.gmra.mrb[0].mxu0 %v487
  %v523 = vpop.f32.mrb[0].mxu0
  %v524 = vadd.f32 0.0, %v523
  %v525 = vpop.f32.mrb[0].mxu0
  %v526 = vpop.f32.mrb[0].mxu0
  %v527 = vadd.f32 0.0, %v526
  %v528 = vpop.f32.mrb[0].mxu0
  %529 = vdwg.mxu0
  %v538 = vunpack.c.l.b16 %v437
  %v539 = vunpack.c.l.b16 %v438
  %v540 = vunpack.c.l.b16 %v439
  %v541 = vunpack.c.l.b16 %v440
  %v542 = vunpack.c.l.b16 %v441
  %v543 = vunpack.c.l.b16 %v442
  %v544 = vunpack.c.l.b16 %v443
  %v545 = vunpack.c.l.b16 %v444
  %v546 = vpack.c.b16 %v539, %v538
  %v547 = vpack.c.b16 %v541, %v540
  %v548 = vpack.c.b16 %v543, %v542
  %v549 = vpack.c.b16 %v545, %v544
  %v554 = vsel %vm485, %v435, 0
  %556 = vmatprep.subr.bf16.mxu0 0
  %557 = vmatpush1.bf16.msra.mxu0 %v546
  %558 = vmatprep.subr.bf16.mxu0 0
  %559 = vmatpush1.bf16.msra.mxu0 %v547
  %560 = vmatprep.subr.bf16.mxu0 0
  %561 = vmatpush1.bf16.msra.mxu0 %v548
  %562 = vmatprep.subr.bf16.mxu0 0
  %563 = vmatpush1.bf16.msra.mxu0 %v549
  %564 = vmatprep.subr.bf16.mxu0 0
  %565 = vmatpush1.bf16.msra.mxu0 0
  %566 = vmatprep.subr.bf16.mxu0 0
  %567 = vmatpush1.bf16.msra.mxu0 0
  %568 = vmatprep.subr.bf16.mxu0 0
  %569 = vmatpush1.bf16.msra.mxu0 0
  %570 = vmatprep.subr.bf16.mxu0 0
  %571 = vmatpush1.bf16.msra.mxu0 0
  %572 = vmatprep.subr.bf16.mxu0 0
  %573 = vmatpush1.bf16.msra.mxu0 0
  %574 = vmatprep.subr.bf16.mxu0 0
  %575 = vmatpush1.bf16.msra.mxu0 0
  %576 = vmatprep.subr.bf16.mxu0 0
  %577 = vmatpush1.bf16.msra.mxu0 0
  %578 = vmatprep.subr.bf16.mxu0 0
  %579 = vmatpush1.bf16.msra.mxu0 0
  %580 = vmatprep.subr.bf16.mxu0 0
  %581 = vmatpush1.bf16.msra.mxu0 0
  %582 = vmatprep.subr.bf16.mxu0 0
  %583 = vmatpush1.bf16.msra.mxu0 0
  %584 = vmatprep.subr.bf16.mxu0 0
  %585 = vmatpush1.bf16.msra.mxu0 0
  %586 = vmatprep.subr.bf16.mxu0 0
  %587 = vmatpush1.bf16.msra.mxu0 0
  %588 = vmatprep.mubr.bf16.mxu0 0
  %589 = vmatmul.mubr.bf16.gmra.mrb[0].mxu0 %v554
  %v590 = vpop.f32.mrb[0].mxu0
  %v591 = vadd.f32 %v524, %v590
  %v592 = vpop.f32.mrb[0].mxu0
  %v593 = vpop.f32.mrb[0].mxu0
  %v594 = vadd.f32 %v527, %v593
  %v595 = vpop.f32.mrb[0].mxu0
  %596 = vdwg.mxu0
  %s597 = scalar_lea.vmem %s3, 64
  %v598 = vld [vmem:[%s597] sm:$0xf]
  %v599 = vld [vmem:[%s597 + $0x4] sm:$0xf]
  %v600 = vld [vmem:[%s597 + $0x8] sm:$0xf]
  %v601 = vld [vmem:[%s597 + $0xc] sm:$0xf]
  %v602 = vld [vmem:[%s597 + $0x10] sm:$0xf]
  %v603 = vld [vmem:[%s597 + $0x14] sm:$0xf]
  %v604 = vld [vmem:[%s597 + $0x18] sm:$0xf]
  %v605 = vld [vmem:[%s597 + $0x1c] sm:$0xf]
  %v607 = vrot.slane %v435, 1
  %v616 = vunpack.c.l.b16 %v598
  %v617 = vunpack.c.l.b16 %v599
  %v618 = vunpack.c.l.b16 %v600
  %v619 = vunpack.c.l.b16 %v601
  %v620 = vunpack.c.l.b16 %v602
  %v621 = vunpack.c.l.b16 %v603
  %v622 = vunpack.c.l.b16 %v604
  %v623 = vunpack.c.l.b16 %v605
  %v624 = vpack.c.b16 %v617, %v616
  %v625 = vpack.c.b16 %v619, %v618
  %v626 = vpack.c.b16 %v621, %v620
  %v627 = vpack.c.b16 %v623, %v622
  %v633 = vsel %vm485, %v607, 0
  %635 = vmatprep.subr.bf16.mxu0 0
  %636 = vmatpush1.bf16.msra.mxu0 %v624
  %637 = vmatprep.subr.bf16.mxu0 0
  %638 = vmatpush1.bf16.msra.mxu0 %v625
  %639 = vmatprep.subr.bf16.mxu0 0
  %640 = vmatpush1.bf16.msra.mxu0 %v626
  %641 = vmatprep.subr.bf16.mxu0 0
  %642 = vmatpush1.bf16.msra.mxu0 %v627
  %643 = vmatprep.subr.bf16.mxu0 0
  %644 = vmatpush1.bf16.msra.mxu0 0
  %645 = vmatprep.subr.bf16.mxu0 0
  %646 = vmatpush1.bf16.msra.mxu0 0
  %647 = vmatprep.subr.bf16.mxu0 0
  %648 = vmatpush1.bf16.msra.mxu0 0
  %649 = vmatprep.subr.bf16.mxu0 0
  %650 = vmatpush1.bf16.msra.mxu0 0
  %651 = vmatprep.subr.bf16.mxu0 0
  %652 = vmatpush1.bf16.msra.mxu0 0
  %653 = vmatprep.subr.bf16.mxu0 0
  %654 = vmatpush1.bf16.msra.mxu0 0
  %655 = vmatprep.subr.bf16.mxu0 0
  %656 = vmatpush1.bf16.msra.mxu0 0
  %657 = vmatprep.subr.bf16.mxu0 0
  %658 = vmatpush1.bf16.msra.mxu0 0
  %659 = vmatprep.subr.bf16.mxu0 0
  %660 = vmatpush1.bf16.msra.mxu0 0
  %661 = vmatprep.subr.bf16.mxu0 0
  %662 = vmatpush1.bf16.msra.mxu0 0
  %663 = vmatprep.subr.bf16.mxu0 0
  %664 = vmatpush1.bf16.msra.mxu0 0
  %665 = vmatprep.subr.bf16.mxu0 0
  %666 = vmatpush1.bf16.msra.mxu0 0
  %667 = vmatprep.mubr.bf16.mxu0 0
  %668 = vmatmul.mubr.bf16.gmra.mrb[0].mxu0 %v633
  %v669 = vpop.f32.mrb[0].mxu0
  %v670 = vadd.f32 0.0, %v669
  %v671 = vpop.f32.mrb[0].mxu0
  %v672 = vpop.f32.mrb[0].mxu0
  %v673 = vadd.f32 0.0, %v672
  %v674 = vpop.f32.mrb[0].mxu0
  %675 = vdwg.mxu0
  %v676 = vadd.f32 %v591, %v670
  %v677 = vadd.f32 %v594, %v673
  %s678 = scalar_lea.vmem %s3, 96
  %v679 = vld [vmem:[%s678] sm:$0xf]
  %v680 = vld [vmem:[%s678 + $0x4] sm:$0xf]
  %v681 = vld [vmem:[%s678 + $0x8] sm:$0xf]
  %v682 = vld [vmem:[%s678 + $0xc] sm:$0xf]
  %v683 = vld [vmem:[%s678 + $0x10] sm:$0xf]
  %v684 = vld [vmem:[%s678 + $0x14] sm:$0xf]
  %v685 = vld [vmem:[%s678 + $0x18] sm:$0xf]
  %v686 = vld [vmem:[%s678 + $0x1c] sm:$0xf]
  %v687 = vrot.slane %v455, 1
  %v688 = vrot.slane %v457, 2
  %v689 = vor.u32 %v687, %v688
  %v698 = vunpack.c.l.b16 %v679
  %v699 = vunpack.c.l.b16 %v680
  %v700 = vunpack.c.l.b16 %v681
  %v701 = vunpack.c.l.b16 %v682
  %v702 = vunpack.c.l.b16 %v683
  %v703 = vunpack.c.l.b16 %v684
  %v704 = vunpack.c.l.b16 %v685
  %v705 = vunpack.c.l.b16 %v686
  %v706 = vpack.c.b16 %v699, %v698
  %v707 = vpack.c.b16 %v701, %v700
  %v708 = vpack.c.b16 %v703, %v702
  %v709 = vpack.c.b16 %v705, %v704
  %v715 = vsel %vm485, %v689, 0
  %717 = vmatprep.subr.bf16.mxu0 0
  %718 = vmatpush1.bf16.msra.mxu0 %v706
  %719 = vmatprep.subr.bf16.mxu0 0
  %720 = vmatpush1.bf16.msra.mxu0 %v707
  %721 = vmatprep.subr.bf16.mxu0 0
  %722 = vmatpush1.bf16.msra.mxu0 %v708
  %723 = vmatprep.subr.bf16.mxu0 0
  %724 = vmatpush1.bf16.msra.mxu0 %v709
  %725 = vmatprep.subr.bf16.mxu0 0
  %726 = vmatpush1.bf16.msra.mxu0 0
  %727 = vmatprep.subr.bf16.mxu0 0
  %728 = vmatpush1.bf16.msra.mxu0 0
  %729 = vmatprep.subr.bf16.mxu0 0
  %730 = vmatpush1.bf16.msra.mxu0 0
  %731 = vmatprep.subr.bf16.mxu0 0
  %732 = vmatpush1.bf16.msra.mxu0 0
  %733 = vmatprep.subr.bf16.mxu0 0
  %734 = vmatpush1.bf16.msra.mxu0 0
  %735 = vmatprep.subr.bf16.mxu0 0
  %736 = vmatpush1.bf16.msra.mxu0 0
  %737 = vmatprep.subr.bf16.mxu0 0
  %738 = vmatpush1.bf16.msra.mxu0 0
  %739 = vmatprep.subr.bf16.mxu0 0
  %740 = vmatpush1.bf16.msra.mxu0 0
  %741 = vmatprep.subr.bf16.mxu0 0
  %742 = vmatpush1.bf16.msra.mxu0 0
  %743 = vmatprep.subr.bf16.mxu0 0
  %744 = vmatpush1.bf16.msra.mxu0 0
  %745 = vmatprep.subr.bf16.mxu0 0
  %746 = vmatpush1.bf16.msra.mxu0 0
  %747 = vmatprep.subr.bf16.mxu0 0
  %748 = vmatpush1.bf16.msra.mxu0 0
  %749 = vmatprep.mubr.bf16.mxu0 0
  %750 = vmatmul.mubr.bf16.gmra.mrb[0].mxu0 %v715
  %v751 = vpop.f32.mrb[0].mxu0
  %v752 = vadd.f32 0.0, %v751
  %v753 = vpop.f32.mrb[0].mxu0
  %v754 = vpop.f32.mrb[0].mxu0
  %v755 = vadd.f32 0.0, %v754
  %v756 = vpop.f32.mrb[0].mxu0
  %757 = vdwg.mxu0
  %v758 = vadd.f32 %v676, %v752
  %v759 = vadd.f32 %v677, %v755
  %s760 = scalar_lea.vmem %s3, 128
  %v761 = vld [vmem:[%s760] sm:$0xf]
  %v762 = vld [vmem:[%s760 + $0x4] sm:$0xf]
  %v763 = vld [vmem:[%s760 + $0x8] sm:$0xf]
  %v764 = vld [vmem:[%s760 + $0xc] sm:$0xf]
  %v765 = vld [vmem:[%s760 + $0x10] sm:$0xf]
  %v766 = vld [vmem:[%s760 + $0x14] sm:$0xf]
  %v767 = vld [vmem:[%s760 + $0x18] sm:$0xf]
  %v768 = vld [vmem:[%s760 + $0x1c] sm:$0xf]
  %v769 = vrot.slane %v435, 2
  %v778 = vunpack.c.l.b16 %v761
  %v779 = vunpack.c.l.b16 %v762
  %v780 = vunpack.c.l.b16 %v763
  %v781 = vunpack.c.l.b16 %v764
  %v782 = vunpack.c.l.b16 %v765
  %v783 = vunpack.c.l.b16 %v766
  %v784 = vunpack.c.l.b16 %v767
  %v785 = vunpack.c.l.b16 %v768
  %v786 = vpack.c.b16 %v779, %v778
  %v787 = vpack.c.b16 %v781, %v780
  %v788 = vpack.c.b16 %v783, %v782
  %v789 = vpack.c.b16 %v785, %v784
  %v795 = vsel %vm485, %v769, 0
  %797 = vmatprep.subr.bf16.mxu0 0
  %798 = vmatpush1.bf16.msra.mxu0 %v786
  %799 = vmatprep.subr.bf16.mxu0 0
  %800 = vmatpush1.bf16.msra.mxu0 %v787
  %801 = vmatprep.subr.bf16.mxu0 0
  %802 = vmatpush1.bf16.msra.mxu0 %v788
  %803 = vmatprep.subr.bf16.mxu0 0
  %804 = vmatpush1.bf16.msra.mxu0 %v789
  %805 = vmatprep.subr.bf16.mxu0 0
  %806 = vmatpush1.bf16.msra.mxu0 0
  %807 = vmatprep.subr.bf16.mxu0 0
  %808 = vmatpush1.bf16.msra.mxu0 0
  %809 = vmatprep.subr.bf16.mxu0 0
  %810 = vmatpush1.bf16.msra.mxu0 0
  %811 = vmatprep.subr.bf16.mxu0 0
  %812 = vmatpush1.bf16.msra.mxu0 0
  %813 = vmatprep.subr.bf16.mxu0 0
  %814 = vmatpush1.bf16.msra.mxu0 0
  %815 = vmatprep.subr.bf16.mxu0 0
  %816 = vmatpush1.bf16.msra.mxu0 0
  %817 = vmatprep.subr.bf16.mxu0 0
  %818 = vmatpush1.bf16.msra.mxu0 0
  %819 = vmatprep.subr.bf16.mxu0 0
  %820 = vmatpush1.bf16.msra.mxu0 0
  %821 = vmatprep.subr.bf16.mxu0 0
  %822 = vmatpush1.bf16.msra.mxu0 0
  %823 = vmatprep.subr.bf16.mxu0 0
  %824 = vmatpush1.bf16.msra.mxu0 0
  %825 = vmatprep.subr.bf16.mxu0 0
  %826 = vmatpush1.bf16.msra.mxu0 0
  %827 = vmatprep.subr.bf16.mxu0 0
  %828 = vmatpush1.bf16.msra.mxu0 0
  %829 = vmatprep.mubr.bf16.mxu0 0
  %830 = vmatmul.mubr.bf16.gmra.mrb[0].mxu0 %v795
  %v831 = vpop.f32.mrb[0].mxu0
  %v832 = vadd.f32 0.0, %v831
  %v833 = vpop.f32.mrb[0].mxu0
  %v834 = vpop.f32.mrb[0].mxu0
  %v835 = vadd.f32 0.0, %v834
  %v836 = vpop.f32.mrb[0].mxu0
  %837 = vdwg.mxu0
  %v838 = vadd.f32 %v758, %v832
  %v839 = vadd.f32 %v759, %v835
  %s840 = scalar_lea.vmem %s3, 160
  %v841 = vld [vmem:[%s840] sm:$0xf]
  %v842 = vld [vmem:[%s840 + $0x4] sm:$0xf]
  %v843 = vld [vmem:[%s840 + $0x8] sm:$0xf]
  %v844 = vld [vmem:[%s840 + $0xc] sm:$0xf]
  %v845 = vld [vmem:[%s840 + $0x10] sm:$0xf]
  %v846 = vld [vmem:[%s840 + $0x14] sm:$0xf]
  %v847 = vld [vmem:[%s840 + $0x18] sm:$0xf]
  %v848 = vld [vmem:[%s840 + $0x1c] sm:$0xf]
  %v849 = vrot.slane %v455, 2
  %v850 = vrot.slane %v457, 3
  %v851 = vor.u32 %v849, %v850
  %v860 = vunpack.c.l.b16 %v841
  %v861 = vunpack.c.l.b16 %v842
  %v862 = vunpack.c.l.b16 %v843
  %v863 = vunpack.c.l.b16 %v844
  %v864 = vunpack.c.l.b16 %v845
  %v865 = vunpack.c.l.b16 %v846
  %v866 = vunpack.c.l.b16 %v847
  %v867 = vunpack.c.l.b16 %v848
  %v868 = vpack.c.b16 %v861, %v860
  %v869 = vpack.c.b16 %v863, %v862
  %v870 = vpack.c.b16 %v865, %v864
  %v871 = vpack.c.b16 %v867, %v866
  %v877 = vsel %vm485, %v851, 0
  %879 = vmatprep.subr.bf16.mxu0 0
  %880 = vmatpush1.bf16.msra.mxu0 %v868
  %881 = vmatprep.subr.bf16.mxu0 0
  %882 = vmatpush1.bf16.msra.mxu0 %v869
  %883 = vmatprep.subr.bf16.mxu0 0
  %884 = vmatpush1.bf16.msra.mxu0 %v870
  %885 = vmatprep.subr.bf16.mxu0 0
  %886 = vmatpush1.bf16.msra.mxu0 %v871
  %887 = vmatprep.subr.bf16.mxu0 0
  %888 = vmatpush1.bf16.msra.mxu0 0
  %889 = vmatprep.subr.bf16.mxu0 0
  %890 = vmatpush1.bf16.msra.mxu0 0
  %891 = vmatprep.subr.bf16.mxu0 0
  %892 = vmatpush1.bf16.msra.mxu0 0
  %893 = vmatprep.subr.bf16.mxu0 0
  %894 = vmatpush1.bf16.msra.mxu0 0
  %895 = vmatprep.subr.bf16.mxu0 0
  %896 = vmatpush1.bf16.msra.mxu0 0
  %897 = vmatprep.subr.bf16.mxu0 0
  %898 = vmatpush1.bf16.msra.mxu0 0
  %899 = vmatprep.subr.bf16.mxu0 0
  %900 = vmatpush1.bf16.msra.mxu0 0
  %901 = vmatprep.subr.bf16.mxu0 0
  %902 = vmatpush1.bf16.msra.mxu0 0
  %903 = vmatprep.subr.bf16.mxu0 0
  %904 = vmatpush1.bf16.msra.mxu0 0
  %905 = vmatprep.subr.bf16.mxu0 0
  %906 = vmatpush1.bf16.msra.mxu0 0
  %907 = vmatprep.subr.bf16.mxu0 0
  %908 = vmatpush1.bf16.msra.mxu0 0
  %909 = vmatprep.subr.bf16.mxu0 0
  %910 = vmatpush1.bf16.msra.mxu0 0
  %911 = vmatprep.mubr.bf16.mxu0 0
  %912 = vmatmul.mubr.bf16.gmra.mrb[0].mxu0 %v877
  %v913 = vpop.f32.mrb[0].mxu0
  %v914 = vadd.f32 0.0, %v913
  %v915 = vpop.f32.mrb[0].mxu0
  %v916 = vpop.f32.mrb[0].mxu0
  %v917 = vadd.f32 0.0, %v916
  %v918 = vpop.f32.mrb[0].mxu0
  %919 = vdwg.mxu0
  %v920 = vadd.f32 %v838, %v914
  %v921 = vadd.f32 %v839, %v917
  %s922 = scalar_lea.vmem %s3, 192
  %v923 = vld [vmem:[%s922] sm:$0xf]
  %v924 = vld [vmem:[%s922 + $0x4] sm:$0xf]
  %v925 = vld [vmem:[%s922 + $0x8] sm:$0xf]
  %v926 = vld [vmem:[%s922 + $0xc] sm:$0xf]
  %v927 = vld [vmem:[%s922 + $0x10] sm:$0xf]
  %v928 = vld [vmem:[%s922 + $0x14] sm:$0xf]
  %v929 = vld [vmem:[%s922 + $0x18] sm:$0xf]
  %v930 = vld [vmem:[%s922 + $0x1c] sm:$0xf]
  %v931 = vrot.slane %v435, 3
  %v940 = vunpack.c.l.b16 %v923
  %v941 = vunpack.c.l.b16 %v924
  %v942 = vunpack.c.l.b16 %v925
  %v943 = vunpack.c.l.b16 %v926
  %v944 = vunpack.c.l.b16 %v927
  %v945 = vunpack.c.l.b16 %v928
  %v946 = vunpack.c.l.b16 %v929
  %v947 = vunpack.c.l.b16 %v930
  %v948 = vpack.c.b16 %v941, %v940
  %v949 = vpack.c.b16 %v943, %v942
  %v950 = vpack.c.b16 %v945, %v944
  %v951 = vpack.c.b16 %v947, %v946
  %v957 = vsel %vm485, %v931, 0
  %959 = vmatprep.subr.bf16.mxu0 0
  %960 = vmatpush1.bf16.msra.mxu0 %v948
  %961 = vmatprep.subr.bf16.mxu0 0
  %962 = vmatpush1.bf16.msra.mxu0 %v949
  %963 = vmatprep.subr.bf16.mxu0 0
  %964 = vmatpush1.bf16.msra.mxu0 %v950
  %965 = vmatprep.subr.bf16.mxu0 0
  %966 = vmatpush1.bf16.msra.mxu0 %v951
  %967 = vmatprep.subr.bf16.mxu0 0
  %968 = vmatpush1.bf16.msra.mxu0 0
  %969 = vmatprep.subr.bf16.mxu0 0
  %970 = vmatpush1.bf16.msra.mxu0 0
  %971 = vmatprep.subr.bf16.mxu0 0
  %972 = vmatpush1.bf16.msra.mxu0 0
  %973 = vmatprep.subr.bf16.mxu0 0
  %974 = vmatpush1.bf16.msra.mxu0 0
  %975 = vmatprep.subr.bf16.mxu0 0
  %976 = vmatpush1.bf16.msra.mxu0 0
  %977 = vmatprep.subr.bf16.mxu0 0
  %978 = vmatpush1.bf16.msra.mxu0 0
  %979 = vmatprep.subr.bf16.mxu0 0
  %980 = vmatpush1.bf16.msra.mxu0 0
  %981 = vmatprep.subr.bf16.mxu0 0
  %982 = vmatpush1.bf16.msra.mxu0 0
  %983 = vmatprep.subr.bf16.mxu0 0
  %984 = vmatpush1.bf16.msra.mxu0 0
  %985 = vmatprep.subr.bf16.mxu0 0
  %986 = vmatpush1.bf16.msra.mxu0 0
  %987 = vmatprep.subr.bf16.mxu0 0
  %988 = vmatpush1.bf16.msra.mxu0 0
  %989 = vmatprep.subr.bf16.mxu0 0
  %990 = vmatpush1.bf16.msra.mxu0 0
  %991 = vmatprep.mubr.bf16.mxu0 0
  %992 = vmatmul.mubr.bf16.gmra.mrb[0].mxu0 %v957
  %v993 = vpop.f32.mrb[0].mxu0
  %v994 = vadd.f32 0.0, %v993
  %v995 = vpop.f32.mrb[0].mxu0
  %v996 = vpop.f32.mrb[0].mxu0
  %v997 = vadd.f32 0.0, %v996
  %v998 = vpop.f32.mrb[0].mxu0
  %999 = vdwg.mxu0
  %v1000 = vadd.f32 %v920, %v994
  %v1001 = vadd.f32 %v921, %v997
  %s1002 = scalar_lea.vmem %s3, 224
  %v1003 = vld [vmem:[%s1002] sm:$0xf]
  %v1004 = vld [vmem:[%s1002 + $0x4] sm:$0xf]
  %v1005 = vld [vmem:[%s1002 + $0x8] sm:$0xf]
  %v1006 = vld [vmem:[%s1002 + $0xc] sm:$0xf]
  %v1007 = vld [vmem:[%s1002 + $0x10] sm:$0xf]
  %v1008 = vld [vmem:[%s1002 + $0x14] sm:$0xf]
  %v1009 = vld [vmem:[%s1002 + $0x18] sm:$0xf]
  %v1010 = vld [vmem:[%s1002 + $0x1c] sm:$0xf]
  %vm1011 = vsmask.f32 4352
  %v1012 = vrot.slane %v455, 3
  %v1013 = vrot.slane %v457, 4
  %v1014 = vor.u32 %v1012, %v1013
  %v1016 = vshll.u32 %v436, 16
  %v1018 = vrot.slane %v1016, 4
  %v1019 = vsel %vm1011, %v1014, %v1018
  %v1028 = vunpack.c.l.b16 %v1003
  %v1029 = vunpack.c.l.b16 %v1004
  %v1030 = vunpack.c.l.b16 %v1005
  %v1031 = vunpack.c.l.b16 %v1006
  %v1032 = vunpack.c.l.b16 %v1007
  %v1033 = vunpack.c.l.b16 %v1008
  %v1034 = vunpack.c.l.b16 %v1009
  %v1035 = vunpack.c.l.b16 %v1010
  %v1036 = vpack.c.b16 %v1029, %v1028
  %v1037 = vpack.c.b16 %v1031, %v1030
  %v1038 = vpack.c.b16 %v1033, %v1032
  %v1039 = vpack.c.b16 %v1035, %v1034
  %v1045 = vsel %vm485, %v1019, 0
  %1047 = vmatprep.subr.bf16.mxu0 0
  %1048 = vmatpush1.bf16.msra.mxu0 %v1036
  %1049 = vmatprep.subr.bf16.mxu0 0
  %1050 = vmatpush1.bf16.msra.mxu0 %v1037
  %1051 = vmatprep.subr.bf16.mxu0 0
  %1052 = vmatpush1.bf16.msra.mxu0 %v1038
  %1053 = vmatprep.subr.bf16.mxu0 0
  %1054 = vmatpush1.bf16.msra.mxu0 %v1039
  %1055 = vmatprep.subr.bf16.mxu0 0
  %1056 = vmatpush1.bf16.msra.mxu0 0
  %1057 = vmatprep.subr.bf16.mxu0 0
  %1058 = vmatpush1.bf16.msra.mxu0 0
  %1059 = vmatprep.subr.bf16.mxu0 0
  %1060 = vmatpush1.bf16.msra.mxu0 0
  %1061 = vmatprep.subr.bf16.mxu0 0
  %1062 = vmatpush1.bf16.msra.mxu0 0
  %1063 = vmatprep.subr.bf16.mxu0 0
  %1064 = vmatpush1.bf16.msra.mxu0 0
  %1065 = vmatprep.subr.bf16.mxu0 0
  %1066 = vmatpush1.bf16.msra.mxu0 0
  %1067 = vmatprep.subr.bf16.mxu0 0
  %1068 = vmatpush1.bf16.msra.mxu0 0
  %1069 = vmatprep.subr.bf16.mxu0 0
  %1070 = vmatpush1.bf16.msra.mxu0 0
  %1071 = vmatprep.subr.bf16.mxu0 0
  %1072 = vmatpush1.bf16.msra.mxu0 0
  %1073 = vmatprep.subr.bf16.mxu0 0
  %1074 = vmatpush1.bf16.msra.mxu0 0
  %1075 = vmatprep.subr.bf16.mxu0 0
  %1076 = vmatpush1.bf16.msra.mxu0 0
  %1077 = vmatprep.subr.bf16.mxu0 0
  %1078 = vmatpush1.bf16.msra.mxu0 0
  %1079 = vmatprep.mubr.bf16.mxu0 0
  %1080 = vmatmul.mubr.bf16.gmra.mrb[0].mxu0 %v1045
  %v1081 = vpop.f32.mrb[0].mxu0
  %v1082 = vadd.f32 0.0, %v1081
  %v1083 = vpop.f32.mrb[0].mxu0
  %v1084 = vpop.f32.mrb[0].mxu0
  %v1085 = vadd.f32 0.0, %v1084
  %v1086 = vpop.f32.mrb[0].mxu0
  %1087 = vdwg.mxu0
  %v1088 = vadd.f32 %v1000, %v1082
  %v1089 = vadd.f32 %v1001, %v1085
  %s1090 = scalar_lea.vmem %s3, 256
  %v1091 = vld [vmem:[%s1090] sm:$0xf]
  %v1092 = vld [vmem:[%s1090 + $0x4] sm:$0xf]
  %v1093 = vld [vmem:[%s1090 + $0x8] sm:$0xf]
  %v1094 = vld [vmem:[%s1090 + $0xc] sm:$0xf]
  %v1095 = vld [vmem:[%s1090 + $0x10] sm:$0xf]
  %v1096 = vld [vmem:[%s1090 + $0x14] sm:$0xf]
  %v1097 = vld [vmem:[%s1090 + $0x18] sm:$0xf]
  %v1098 = vld [vmem:[%s1090 + $0x1c] sm:$0xf]
  %vm1100 = vcmask 1043456
  %v1101 = vrot.slane %v435, 4
  %v1102 = vrot.slane %v436, 4
  %v1103 = vsel %vm1100, %v1101, %v1102
  %v1112 = vunpack.c.l.b16 %v1091
  %v1113 = vunpack.c.l.b16 %v1092
  %v1114 = vunpack.c.l.b16 %v1093
  %v1115 = vunpack.c.l.b16 %v1094
  %v1116 = vunpack.c.l.b16 %v1095
  %v1117 = vunpack.c.l.b16 %v1096
  %v1118 = vunpack.c.l.b16 %v1097
  %v1119 = vunpack.c.l.b16 %v1098
  %v1120 = vpack.c.b16 %v1113, %v1112
  %v1121 = vpack.c.b16 %v1115, %v1114
  %v1122 = vpack.c.b16 %v1117, %v1116
  %v1123 = vpack.c.b16 %v1119, %v1118
  %v1129 = vsel %vm485, %v1103, 0
  %1131 = vmatprep.subr.bf16.mxu0 0
  %1132 = vmatpush1.bf16.msra.mxu0 %v1120
  %1133 = vmatprep.subr.bf16.mxu0 0
  %1134 = vmatpush1.bf16.msra.mxu0 %v1121
  %1135 = vmatprep.subr.bf16.mxu0 0
  %1136 = vmatpush1.bf16.msra.mxu0 %v1122
  %1137 = vmatprep.subr.bf16.mxu0 0
  %1138 = vmatpush1.bf16.msra.mxu0 %v1123
  %1139 = vmatprep.subr.bf16.mxu0 0
  %1140 = vmatpush1.bf16.msra.mxu0 0
  %1141 = vmatprep.subr.bf16.mxu0 0
  %1142 = vmatpush1.bf16.msra.mxu0 0
  %1143 = vmatprep.subr.bf16.mxu0 0
  %1144 = vmatpush1.bf16.msra.mxu0 0
  %1145 = vmatprep.subr.bf16.mxu0 0
  %1146 = vmatpush1.bf16.msra.mxu0 0
  %1147 = vmatprep.subr.bf16.mxu0 0
  %1148 = vmatpush1.bf16.msra.mxu0 0
  %1149 = vmatprep.subr.bf16.mxu0 0
  %1150 = vmatpush1.bf16.msra.mxu0 0
  %1151 = vmatprep.subr.bf16.mxu0 0
  %1152 = vmatpush1.bf16.msra.mxu0 0
  %1153 = vmatprep.subr.bf16.mxu0 0
  %1154 = vmatpush1.bf16.msra.mxu0 0
  %1155 = vmatprep.subr.bf16.mxu0 0
  %1156 = vmatpush1.bf16.msra.mxu0 0
  %1157 = vmatprep.subr.bf16.mxu0 0
  %1158 = vmatpush1.bf16.msra.mxu0 0
  %1159 = vmatprep.subr.bf16.mxu0 0
  %1160 = vmatpush1.bf16.msra.mxu0 0
  %1161 = vmatprep.subr.bf16.mxu0 0
  %1162 = vmatpush1.bf16.msra.mxu0 0
  %1163 = vmatprep.mubr.bf16.mxu0 0
  %1164 = vmatmul.mubr.bf16.gmra.mrb[0].mxu0 %v1129
  %v1165 = vpop.f32.mrb[0].mxu0
  %v1166 = vadd.f32 0.0, %v1165
  %v1167 = vpop.f32.mrb[0].mxu0
  %v1168 = vpop.f32.mrb[0].mxu0
  %v1169 = vadd.f32 0.0, %v1168
  %v1170 = vpop.f32.mrb[0].mxu0
  %1171 = vdwg.mxu0
  %v1172 = vadd.f32 %v1088, %v1166
  %v1173 = vadd.f32 %v1089, %v1169
  %v1174 = vld [vmem:[%s4] sm:$0x1]
  %v1176 = vlaneseq
  %v1177 = vshrl.u32 %v1176, 7
  %v1178 = vsub.s32 0, %v1177
  %v1179 = vrot.slane %v1174, %v1178
  %v1181 = vadd.f32 %v1172, %v1179
  %v1182 = vadd.f32 %v1173, %v1179
  %v1183 = vmax.f32 %v1181, 0.0
  %v1184 = vmax.f32 %v1182, 0.0
  %v1185 = vpack.c.bf16 %v1184, %v1183
  %v1187 = vunpack.c.l.b16 %v1185
  %v1188 = vunpack.c.h.b16 %v1185
  %v1189 = vpack.c.b16 %v1187, %v1187
  %v1190 = vpack.c.b16 %v1188, %v1188
  %vm1193 = vcmask 519168
  %1194 = vst.msk [vmem:[#allocation2] sm:$0xf] %vm1193, %v1189
  %vm1195 = vcmask 516096
  %vm1196 = vsmask.f32 256
  %vm1197 = vmand %vm1195, %vm1196
  %v1198 = vld [vmem:[#allocation2 + $0x4] sm:$0x1]
  %v1199 = vsel %vm1197, %v1190, %v1198
  %1200 = vst [vmem:[#allocation2 + $0x4] sm:$0x1] %v1199
  %v1202 = vshrl.u32 %v1190, 16
  %v1204 = vrot.slane %v1202, 4
  %v1205 = vrot.slane %v1204, 4
  %s1207 = scalar_lea.vmem [#allocation2], 8
  %v1208 = vld [vmem:[%s1207] sm:$0x1]
  %v1209 = vsel %vm1197, %v1205, %v1208
  %1210 = vst [vmem:[%s1207] sm:$0x1] %v1209
  %v1211 = vld [vmem:[#allocation2] sm:$0x1]
  %v1212 = vld [vmem:[#allocation2 + $0x8] sm:$0x1]
  %v1213 = vld [vmem:[%s5] sm:$0xff]
  %v1214 = vld [vmem:[%s5 + $0x8] sm:$0xff]
  %v1215 = vld [vmem:[%s5 + $0x10] sm:$0xff]
  %v1216 = vld [vmem:[%s5 + $0x18] sm:$0xff]
  %v1217 = vld [vmem:[%s5 + $0x20] sm:$0xff]
  %v1218 = vld [vmem:[%s5 + $0x28] sm:$0xff]
  %v1219 = vld [vmem:[%s5 + $0x30] sm:$0xff]
  %v1220 = vld [vmem:[%s5 + $0x38] sm:$0xff]
  %v1221 = vld [vmem:[%s5 + $0x40] sm:$0xff]
  %v1222 = vld [vmem:[%s5 + $0x48] sm:$0xff]
  %v1223 = vld [vmem:[%s5 + $0x50] sm:$0xff]
  %v1224 = vld [vmem:[%s5 + $0x58] sm:$0xff]
  %v1225 = vld [vmem:[%s5 + $0x60] sm:$0xff]
  %v1226 = vld [vmem:[%s5 + $0x68] sm:$0xff]
  %v1227 = vld [vmem:[%s5 + $0x70] sm:$0xff]
  %v1228 = vld [vmem:[%s5 + $0x78] sm:$0xff]
  %v1229 = vld [vmem:[%s6] sm:$0xf]
  %v1231 = vlaneseq
  %v1232 = vshrl.u32 %v1231, 7
  %v1233 = vsub.s32 0, %v1232
  %v1234 = vrot.slane %v1229, %v1233
  %v1235 = vlaneseq
  %v1236 = vshrl.u32 %v1235, 7
  %v1237 = vsub.s32 1, %v1236
  %v1238 = vrot.slane %v1229, %v1237
  %v1239 = vlaneseq
  %v1240 = vshrl.u32 %v1239, 7
  %v1241 = vsub.s32 2, %v1240
  %v1242 = vrot.slane %v1229, %v1241
  %v1243 = vlaneseq
  %v1244 = vshrl.u32 %v1243, 7
  %v1245 = vsub.s32 3, %v1244
  %v1246 = vrot.slane %v1229, %v1245
  %v1253 = vunpack.c.l.b16 %v1211
  %v1254 = vunpack.c.l.b16 %v1212
  %v1255 = vpack.c.b16 %v1253, %v1253
  %v1256 = vpack.c.b16 %v1254, %v1254
  %v1257 = vunpack.c.l.b16 %v1255
  %v1258 = vunpack.c.l.b16 %v1256
  %v1259 = vrot.slane %v1258, 7
  %vm1260 = vcmask 1041409
  %v1261 = vsel %vm1260, %v1259, %v1257
  %v1262 = vpack.c.b16 %v1261, %v1261
  %v1279 = vunpack.c.l.b16 %v1213
  %v1280 = vunpack.c.h.b16 %v1213
  %v1281 = vunpack.c.l.b16 %v1214
  %v1282 = vunpack.c.h.b16 %v1214
  %v1283 = vunpack.c.l.b16 %v1215
  %v1284 = vunpack.c.h.b16 %v1215
  %v1285 = vunpack.c.l.b16 %v1216
  %v1286 = vunpack.c.h.b16 %v1216
  %v1287 = vunpack.c.l.b16 %v1217
  %v1288 = vunpack.c.h.b16 %v1217
  %v1289 = vunpack.c.l.b16 %v1218
  %v1290 = vunpack.c.h.b16 %v1218
  %v1291 = vunpack.c.l.b16 %v1219
  %v1292 = vunpack.c.h.b16 %v1219
  %v1293 = vunpack.c.l.b16 %v1220
  %v1294 = vunpack.c.h.b16 %v1220
  %v1295 = vunpack.c.l.b16 %v1221
  %v1296 = vunpack.c.h.b16 %v1221
  %v1297 = vunpack.c.l.b16 %v1222
  %v1298 = vunpack.c.h.b16 %v1222
  %v1299 = vunpack.c.l.b16 %v1223
  %v1300 = vunpack.c.h.b16 %v1223
  %v1301 = vunpack.c.l.b16 %v1224
  %v1302 = vunpack.c.h.b16 %v1224
  %v1303 = vunpack.c.l.b16 %v1225
  %v1304 = vunpack.c.h.b16 %v1225
  %v1305 = vunpack.c.l.b16 %v1226
  %v1306 = vunpack.c.h.b16 %v1226
  %v1307 = vunpack.c.l.b16 %v1227
  %v1308 = vunpack.c.h.b16 %v1227
  %v1309 = vunpack.c.l.b16 %v1228
  %v1310 = vunpack.c.h.b16 %v1228
  %v1311 = vpack.c.b16 %v1283, %v1279
  %v1312 = vpack.c.b16 %v1284, %v1280
  %v1313 = vpack.c.b16 %v1285, %v1281
  %v1314 = vpack.c.b16 %v1286, %v1282
  %v1315 = vpack.c.b16 %v1291, %v1287
  %v1316 = vpack.c.b16 %v1292, %v1288
  %v1317 = vpack.c.b16 %v1293, %v1289
  %v1318 = vpack.c.b16 %v1294, %v1290
  %v1319 = vpack.c.b16 %v1299, %v1295
  %v1320 = vpack.c.b16 %v1300, %v1296
  %v1321 = vpack.c.b16 %v1301, %v1297
  %v1322 = vpack.c.b16 %v1302, %v1298
  %v1323 = vpack.c.b16 %v1307, %v1303
  %v1324 = vpack.c.b16 %v1308, %v1304
  %v1325 = vpack.c.b16 %v1309, %v1305
  %v1326 = vpack.c.b16 %v1310, %v1306
  %v1344 = vsel %vm485, %v1262, 0
  %1346 = vmatprep.subr.bf16.mxu0 %v1312
  %1347 = vmatpush1.bf16.msra.mxu0 %v1311
  %1348 = vmatprep.subr.bf16.mxu0 %v1316
  %1349 = vmatpush1.bf16.msra.mxu0 %v1315
  %1350 = vmatprep.subr.bf16.mxu0 %v1320
  %1351 = vmatpush1.bf16.msra.mxu0 %v1319
  %1352 = vmatprep.subr.bf16.mxu0 %v1324
  %1353 = vmatpush1.bf16.msra.mxu0 %v1323
  %1354 = vmatprep.subr.bf16.mxu0 0
  %1355 = vmatpush1.bf16.msra.mxu0 0
  %1356 = vmatprep.subr.bf16.mxu0 0
  %1357 = vmatpush1.bf16.msra.mxu0 0
  %1358 = vmatprep.subr.bf16.mxu0 0
  %1359 = vmatpush1.bf16.msra.mxu0 0
  %1360 = vmatprep.subr.bf16.mxu0 0
  %1361 = vmatpush1.bf16.msra.mxu0 0
  %1362 = vmatprep.subr.bf16.mxu0 0
  %1363 = vmatpush1.bf16.msra.mxu0 0
  %1364 = vmatprep.subr.bf16.mxu0 0
  %1365 = vmatpush1.bf16.msra.mxu0 0
  %1366 = vmatprep.subr.bf16.mxu0 0
  %1367 = vmatpush1.bf16.msra.mxu0 0
  %1368 = vmatprep.subr.bf16.mxu0 0
  %1369 = vmatpush1.bf16.msra.mxu0 0
  %1370 = vmatprep.subr.bf16.mxu0 0
  %1371 = vmatpush1.bf16.msra.mxu0 0
  %1372 = vmatprep.subr.bf16.mxu0 0
  %1373 = vmatpush1.bf16.msra.mxu0 0
  %1374 = vmatprep.subr.bf16.mxu0 0
  %1375 = vmatpush1.bf16.msra.mxu0 0
  %1376 = vmatprep.subr.bf16.mxu0 0
  %1377 = vmatpush1.bf16.msra.mxu0 0
  %1378 = vmatprep.mubr.bf16.mxu0 0
  %1379 = vmatmul.mubr.bf16.gmra.mrb[0].mxu0 %v1344
  %v1380 = vpop.f32.mrb[0].mxu0
  %v1381 = vadd.f32 %v1234, %v1380
  %v1382 = vpop.f32.mrb[0].mxu0
  %v1383 = vadd.f32 %v1238, %v1382
  %v1384 = vpop.f32.mrb[0].mxu0
  %v1385 = vpop.f32.mrb[0].mxu0
  %1386 = vdwg.mxu0
  %1387 = vmatprep.subr.bf16.mxu0 %v1314
  %1388 = vmatpush1.bf16.msra.mxu0 %v1313
  %1389 = vmatprep.subr.bf16.mxu0 %v1318
  %1390 = vmatpush1.bf16.msra.mxu0 %v1317
  %1391 = vmatprep.subr.bf16.mxu0 %v1322
  %1392 = vmatpush1.bf16.msra.mxu0 %v1321
  %1393 = vmatprep.subr.bf16.mxu0 %v1326
  %1394 = vmatpush1.bf16.msra.mxu0 %v1325
  %1395 = vmatprep.subr.bf16.mxu0 0
  %1396 = vmatpush1.bf16.msra.mxu0 0
  %1397 = vmatprep.subr.bf16.mxu0 0
  %1398 = vmatpush1.bf16.msra.mxu0 0
  %1399 = vmatprep.subr.bf16.mxu0 0
  %1400 = vmatpush1.bf16.msra.mxu0 0
  %1401 = vmatprep.subr.bf16.mxu0 0
  %1402 = vmatpush1.bf16.msra.mxu0 0
  %1403 = vmatprep.subr.bf16.mxu0 0
  %1404 = vmatpush1.bf16.msra.mxu0 0
  %1405 = vmatprep.subr.bf16.mxu0 0
  %1406 = vmatpush1.bf16.msra.mxu0 0
  %1407 = vmatprep.subr.bf16.mxu0 0
  %1408 = vmatpush1.bf16.msra.mxu0 0
  %1409 = vmatprep.subr.bf16.mxu0 0
  %1410 = vmatpush1.bf16.msra.mxu0 0
  %1411 = vmatprep.subr.bf16.mxu0 0
  %1412 = vmatpush1.bf16.msra.mxu0 0
  %1413 = vmatprep.subr.bf16.mxu0 0
  %1414 = vmatpush1.bf16.msra.mxu0 0
  %1415 = vmatprep.subr.bf16.mxu0 0
  %1416 = vmatpush1.bf16.msra.mxu0 0
  %1417 = vmatprep.subr.bf16.mxu0 0
  %1418 = vmatpush1.bf16.msra.mxu0 0
  %1419 = vmatprep.mubr.bf16.mxu0 0
  %1420 = vmatmul.mubr.bf16.gmra.mrb[0].mxu0 %v1344
  %v1421 = vpop.f32.mrb[0].mxu0
  %v1422 = vadd.f32 %v1242, %v1421
  %v1423 = vpop.f32.mrb[0].mxu0
  %v1424 = vadd.f32 %v1246, %v1423
  %v1425 = vpop.f32.mrb[0].mxu0
  %v1426 = vpop.f32.mrb[0].mxu0
  %1427 = vdwg.mxu0
  %v1428 = vmax.f32 %v1381, 0.0
  %v1429 = vmax.f32 %v1383, 0.0
  %v1430 = vmax.f32 %v1422, 0.0
  %v1431 = vmax.f32 %v1424, 0.0
  %v1432 = vpack.c.bf16 %v1428, %v1428
  %v1433 = vpack.c.bf16 %v1429, %v1429
  %v1434 = vpack.c.bf16 %v1430, %v1430
  %v1435 = vpack.c.bf16 %v1431, %v1431
  %v1436 = vld [vmem:[%s7] sm:$0xf]
  %v1437 = vld [vmem:[%s7 + $0x4] sm:$0xf]
  %v1438 = vld [vmem:[%s7 + $0x8] sm:$0xf]
  %v1439 = vld [vmem:[%s7 + $0xc] sm:$0xf]
  %v1440 = vld [vmem:[%s7 + $0x10] sm:$0xf]
  %v1441 = vld [vmem:[%s7 + $0x14] sm:$0xf]
  %v1442 = vld [vmem:[%s7 + $0x18] sm:$0xf]
  %v1443 = vld [vmem:[%s7 + $0x1c] sm:$0xf]
  %v1444 = vld [vmem:[%s7 + $0x20] sm:$0xf]
  %v1445 = vld [vmem:[%s7 + $0x24] sm:$0xf]
  %v1446 = vld [vmem:[%s7 + $0x28] sm:$0xf]
  %v1447 = vld [vmem:[%s7 + $0x2c] sm:$0xf]
  %v1448 = vld [vmem:[%s7 + $0x30] sm:$0xf]
  %v1449 = vld [vmem:[%s7 + $0x34] sm:$0xf]
  %v1450 = vld [vmem:[%s7 + $0x38] sm:$0xf]
  %v1451 = vld [vmem:[%s7 + $0x3c] sm:$0xf]
  %v1452 = vld [vmem:[%s7 + $0x40] sm:$0xf]
  %v1453 = vld [vmem:[%s7 + $0x44] sm:$0xf]
  %v1454 = vld [vmem:[%s7 + $0x48] sm:$0xf]
  %v1455 = vld [vmem:[%s7 + $0x4c] sm:$0xf]
  %v1456 = vld [vmem:[%s7 + $0x50] sm:$0xf]
  %v1457 = vld [vmem:[%s7 + $0x54] sm:$0xf]
  %v1458 = vld [vmem:[%s7 + $0x58] sm:$0xf]
  %v1459 = vld [vmem:[%s7 + $0x5c] sm:$0xf]
  %v1460 = vld [vmem:[%s7 + $0x60] sm:$0xf]
  %v1461 = vld [vmem:[%s7 + $0x64] sm:$0xf]
  %v1462 = vld [vmem:[%s7 + $0x68] sm:$0xf]
  %v1463 = vld [vmem:[%s7 + $0x6c] sm:$0xf]
  %v1464 = vld [vmem:[%s7 + $0x70] sm:$0xf]
  %v1465 = vld [vmem:[%s7 + $0x74] sm:$0xf]
  %v1466 = vld [vmem:[%s7 + $0x78] sm:$0xf]
  %v1467 = vld [vmem:[%s7 + $0x7c] sm:$0xf]
  %v1468 = vld [vmem:[%s7 + $0x80] sm:$0xf]
  %v1469 = vld [vmem:[%s7 + $0x84] sm:$0xf]
  %v1470 = vld [vmem:[%s7 + $0x88] sm:$0xf]
  %v1471 = vld [vmem:[%s7 + $0x8c] sm:$0xf]
  %v1472 = vld [vmem:[%s7 + $0x90] sm:$0xf]
  %v1473 = vld [vmem:[%s7 + $0x94] sm:$0xf]
  %v1474 = vld [vmem:[%s7 + $0x98] sm:$0xf]
  %v1475 = vld [vmem:[%s7 + $0x9c] sm:$0xf]
  %v1476 = vld [vmem:[%s7 + $0xa0] sm:$0xf]
  %v1477 = vld [vmem:[%s7 + $0xa4] sm:$0xf]
  %v1478 = vld [vmem:[%s7 + $0xa8] sm:$0xf]
  %v1479 = vld [vmem:[%s7 + $0xac] sm:$0xf]
  %v1480 = vld [vmem:[%s7 + $0xb0] sm:$0xf]
  %v1481 = vld [vmem:[%s7 + $0xb4] sm:$0xf]
  %v1482 = vld [vmem:[%s7 + $0xb8] sm:$0xf]
  %v1483 = vld [vmem:[%s7 + $0xbc] sm:$0xf]
  %v1484 = vld [vmem:[%s7 + $0xc0] sm:$0xf]
  %v1485 = vld [vmem:[%s7 + $0xc4] sm:$0xf]
  %v1486 = vld [vmem:[%s7 + $0xc8] sm:$0xf]
  %v1487 = vld [vmem:[%s7 + $0xcc] sm:$0xf]
  %v1488 = vld [vmem:[%s7 + $0xd0] sm:$0xf]
  %v1489 = vld [vmem:[%s7 + $0xd4] sm:$0xf]
  %v1490 = vld [vmem:[%s7 + $0xd8] sm:$0xf]
  %v1491 = vld [vmem:[%s7 + $0xdc] sm:$0xf]
  %v1492 = vld [vmem:[%s7 + $0xe0] sm:$0xf]
  %v1493 = vld [vmem:[%s7 + $0xe4] sm:$0xf]
  %v1494 = vld [vmem:[%s7 + $0xe8] sm:$0xf]
  %v1495 = vld [vmem:[%s7 + $0xec] sm:$0xf]
  %v1496 = vld [vmem:[%s7 + $0xf0] sm:$0xf]
  %v1497 = vld [vmem:[%s7 + $0xf4] sm:$0xf]
  %v1498 = vld [vmem:[%s7 + $0xf8] sm:$0xf]
  %v1499 = vld [vmem:[%s7 + $0xfc] sm:$0xf]
  %v1500 = vld [vmem:[%s8] sm:$0x1]
  %v1502 = vlaneseq
  %v1503 = vshrl.u32 %v1502, 7
  %v1504 = vsub.s32 0, %v1503
  %v1505 = vrot.slane %v1500, %v1504
  %v1571 = vunpack.c.l.b16 %v1436
  %v1572 = vunpack.c.l.b16 %v1437
  %v1573 = vunpack.c.l.b16 %v1438
  %v1574 = vunpack.c.l.b16 %v1439
  %v1575 = vunpack.c.l.b16 %v1440
  %v1576 = vunpack.c.l.b16 %v1441
  %v1577 = vunpack.c.l.b16 %v1442
  %v1578 = vunpack.c.l.b16 %v1443
  %v1579 = vunpack.c.l.b16 %v1444
  %v1580 = vunpack.c.l.b16 %v1445
  %v1581 = vunpack.c.l.b16 %v1446
  %v1582 = vunpack.c.l.b16 %v1447
  %v1583 = vunpack.c.l.b16 %v1448
  %v1584 = vunpack.c.l.b16 %v1449
  %v1585 = vunpack.c.l.b16 %v1450
  %v1586 = vunpack.c.l.b16 %v1451
  %v1587 = vunpack.c.l.b16 %v1452
  %v1588 = vunpack.c.l.b16 %v1453
  %v1589 = vunpack.c.l.b16 %v1454
  %v1590 = vunpack.c.l.b16 %v1455
  %v1591 = vunpack.c.l.b16 %v1456
  %v1592 = vunpack.c.l.b16 %v1457
  %v1593 = vunpack.c.l.b16 %v1458
  %v1594 = vunpack.c.l.b16 %v1459
  %v1595 = vunpack.c.l.b16 %v1460
  %v1596 = vunpack.c.l.b16 %v1461
  %v1597 = vunpack.c.l.b16 %v1462
  %v1598 = vunpack.c.l.b16 %v1463
  %v1599 = vunpack.c.l.b16 %v1464
  %v1600 = vunpack.c.l.b16 %v1465
  %v1601 = vunpack.c.l.b16 %v1466
  %v1602 = vunpack.c.l.b16 %v1467
  %v1603 = vunpack.c.l.b16 %v1468
  %v1604 = vunpack.c.l.b16 %v1469
  %v1605 = vunpack.c.l.b16 %v1470
  %v1606 = vunpack.c.l.b16 %v1471
  %v1607 = vunpack.c.l.b16 %v1472
  %v1608 = vunpack.c.l.b16 %v1473
  %v1609 = vunpack.c.l.b16 %v1474
  %v1610 = vunpack.c.l.b16 %v1475
  %v1611 = vunpack.c.l.b16 %v1476
  %v1612 = vunpack.c.l.b16 %v1477
  %v1613 = vunpack.c.l.b16 %v1478
  %v1614 = vunpack.c.l.b16 %v1479
  %v1615 = vunpack.c.l.b16 %v1480
  %v1616 = vunpack.c.l.b16 %v1481
  %v1617 = vunpack.c.l.b16 %v1482
  %v1618 = vunpack.c.l.b16 %v1483
  %v1619 = vunpack.c.l.b16 %v1484
  %v1620 = vunpack.c.l.b16 %v1485
  %v1621 = vunpack.c.l.b16 %v1486
  %v1622 = vunpack.c.l.b16 %v1487
  %v1623 = vunpack.c.l.b16 %v1488
  %v1624 = vunpack.c.l.b16 %v1489
  %v1625 = vunpack.c.l.b16 %v1490
  %v1626 = vunpack.c.l.b16 %v1491
  %v1627 = vunpack.c.l.b16 %v1492
  %v1628 = vunpack.c.l.b16 %v1493
  %v1629 = vunpack.c.l.b16 %v1494
  %v1630 = vunpack.c.l.b16 %v1495
  %v1631 = vunpack.c.l.b16 %v1496
  %v1632 = vunpack.c.l.b16 %v1497
  %v1633 = vunpack.c.l.b16 %v1498
  %v1634 = vunpack.c.l.b16 %v1499
  %v1635 = vpack.c.b16 %v1572, %v1571
  %v1636 = vpack.c.b16 %v1574, %v1573
  %v1637 = vpack.c.b16 %v1576, %v1575
  %v1638 = vpack.c.b16 %v1578, %v1577
  %v1639 = vpack.c.b16 %v1580, %v1579
  %v1640 = vpack.c.b16 %v1582, %v1581
  %v1641 = vpack.c.b16 %v1584, %v1583
  %v1642 = vpack.c.b16 %v1586, %v1585
  %v1643 = vpack.c.b16 %v1588, %v1587
  %v1644 = vpack.c.b16 %v1590, %v1589
  %v1645 = vpack.c.b16 %v1592, %v1591
  %v1646 = vpack.c.b16 %v1594, %v1593
  %v1647 = vpack.c.b16 %v1596, %v1595
  %v1648 = vpack.c.b16 %v1598, %v1597
  %v1649 = vpack.c.b16 %v1600, %v1599
  %v1650 = vpack.c.b16 %v1602, %v1601
  %v1651 = vpack.c.b16 %v1604, %v1603
  %v1652 = vpack.c.b16 %v1606, %v1605
  %v1653 = vpack.c.b16 %v1608, %v1607
  %v1654 = vpack.c.b16 %v1610, %v1609
  %v1655 = vpack.c.b16 %v1612, %v1611
  %v1656 = vpack.c.b16 %v1614, %v1613
  %v1657 = vpack.c.b16 %v1616, %v1615
  %v1658 = vpack.c.b16 %v1618, %v1617
  %v1659 = vpack.c.b16 %v1620, %v1619
  %v1660 = vpack.c.b16 %v1622, %v1621
  %v1661 = vpack.c.b16 %v1624, %v1623
  %v1662 = vpack.c.b16 %v1626, %v1625
  %v1663 = vpack.c.b16 %v1628, %v1627
  %v1664 = vpack.c.b16 %v1630, %v1629
  %v1665 = vpack.c.b16 %v1632, %v1631
  %v1666 = vpack.c.b16 %v1634, %v1633
  %1699 = vmatprep.subr.bf16.mxu0 0
  %1700 = vmatpush1.bf16.msra.mxu0 %v1635
  %1701 = vmatprep.subr.bf16.mxu0 0
  %1702 = vmatpush1.bf16.msra.mxu0 %v1636
  %1703 = vmatprep.subr.bf16.mxu0 0
  %1704 = vmatpush1.bf16.msra.mxu0 %v1637
  %1705 = vmatprep.subr.bf16.mxu0 0
  %1706 = vmatpush1.bf16.msra.mxu0 %v1638
  %1707 = vmatprep.subr.bf16.mxu0 0
  %1708 = vmatpush1.bf16.msra.mxu0 %v1639
  %1709 = vmatprep.subr.bf16.mxu0 0
  %1710 = vmatpush1.bf16.msra.mxu0 %v1640
  %1711 = vmatprep.subr.bf16.mxu0 0
  %1712 = vmatpush1.bf16.msra.mxu0 %v1641
  %1713 = vmatprep.subr.bf16.mxu0 0
  %1714 = vmatpush1.bf16.msra.mxu0 %v1642
  %1715 = vmatprep.subr.bf16.mxu0 0
  %1716 = vmatpush1.bf16.msra.mxu0 %v1643
  %1717 = vmatprep.subr.bf16.mxu0 0
  %1718 = vmatpush1.bf16.msra.mxu0 %v1644
  %1719 = vmatprep.subr.bf16.mxu0 0
  %1720 = vmatpush1.bf16.msra.mxu0 %v1645
  %1721 = vmatprep.subr.bf16.mxu0 0
  %1722 = vmatpush1.bf16.msra.mxu0 %v1646
  %1723 = vmatprep.subr.bf16.mxu0 0
  %1724 = vmatpush1.bf16.msra.mxu0 %v1647
  %1725 = vmatprep.subr.bf16.mxu0 0
  %1726 = vmatpush1.bf16.msra.mxu0 %v1648
  %1727 = vmatprep.subr.bf16.mxu0 0
  %1728 = vmatpush1.bf16.msra.mxu0 %v1649
  %1729 = vmatprep.subr.bf16.mxu0 0
  %1730 = vmatpush1.bf16.msra.mxu0 %v1650
  %1731 = vmatprep.mubr.bf16.mxu0 %v1433
  %1732 = vmatmul.mubr.bf16.gmra.mrb[0].mxu0 %v1432
  %v1733 = vpop.f32.mrb[0].mxu0
  %v1734 = vadd.f32 %v1505, %v1733
  %v1735 = vpop.f32.mrb[0].mxu0
  %v1736 = vpop.f32.mrb[0].mxu0
  %v1737 = vpop.f32.mrb[0].mxu0
  %1738 = vdwg.mxu0
  %1739 = vmatprep.subr.bf16.mxu0 0
  %1740 = vmatpush1.bf16.msra.mxu0 %v1651
  %1741 = vmatprep.subr.bf16.mxu0 0
  %1742 = vmatpush1.bf16.msra.mxu0 %v1652
  %1743 = vmatprep.subr.bf16.mxu0 0
  %1744 = vmatpush1.bf16.msra.mxu0 %v1653
  %1745 = vmatprep.subr.bf16.mxu0 0
  %1746 = vmatpush1.bf16.msra.mxu0 %v1654
  %1747 = vmatprep.subr.bf16.mxu0 0
  %1748 = vmatpush1.bf16.msra.mxu0 %v1655
  %1749 = vmatprep.subr.bf16.mxu0 0
  %1750 = vmatpush1.bf16.msra.mxu0 %v1656
  %1751 = vmatprep.subr.bf16.mxu0 0
  %1752 = vmatpush1.bf16.msra.mxu0 %v1657
  %1753 = vmatprep.subr.bf16.mxu0 0
  %1754 = vmatpush1.bf16.msra.mxu0 %v1658
  %1755 = vmatprep.subr.bf16.mxu0 0
  %1756 = vmatpush1.bf16.msra.mxu0 %v1659
  %1757 = vmatprep.subr.bf16.mxu0 0
  %1758 = vmatpush1.bf16.msra.mxu0 %v1660
  %1759 = vmatprep.subr.bf16.mxu0 0
  %1760 = vmatpush1.bf16.msra.mxu0 %v1661
  %1761 = vmatprep.subr.bf16.mxu0 0
  %1762 = vmatpush1.bf16.msra.mxu0 %v1662
  %1763 = vmatprep.subr.bf16.mxu0 0
  %1764 = vmatpush1.bf16.msra.mxu0 %v1663
  %1765 = vmatprep.subr.bf16.mxu0 0
  %1766 = vmatpush1.bf16.msra.mxu0 %v1664
  %1767 = vmatprep.subr.bf16.mxu0 0
  %1768 = vmatpush1.bf16.msra.mxu0 %v1665
  %1769 = vmatprep.subr.bf16.mxu0 0
  %1770 = vmatpush1.bf16.msra.mxu0 %v1666
  %1771 = vmatprep.mubr.bf16.mxu0 %v1435
  %1772 = vmatmul.mubr.bf16.gmra.mrb[0].mxu0 %v1434
  %v1773 = vpop.f32.mrb[0].mxu0
  %v1774 = vadd.f32 %v1734, %v1773
  %v1775 = vpop.f32.mrb[0].mxu0
  %v1776 = vpop.f32.mrb[0].mxu0
  %v1777 = vpop.f32.mrb[0].mxu0
  %1778 = vdwg.mxu0
  %v1779 = vlaneseq
  %v1780 = vand.u32 %v1779, 127
  %vm1781 = vcmp.ge.s32.totalorder %v1780, 0
  %vm1782 = vcmp.lt.s32.totalorder %v1780, 4
  %vm1783 = vmand %vm1781, %vm1782
  %v1784 = vsel %vm1783, %v1774, -inf
  %vm1785 = vcmask 1041408
  %v1786 = vsel %vm1785, %v1784, -inf
  %1787 = vmax.xlane.f32.xlu0 %v1786
  %v1788 = vpop.xlane.xlu0 %1787
  %v1789 = vsub.f32 %v1784, %v1788
  %v1790 = vmul.f32 %v1789, 1.442695
  %v1791 = vpow.pop %v1790
  %v1792 = vsel %vm1783, %v1791, 0.0
  %v1793 = vsel %vm1785, %v1792, 0.0
  %1794 = vadd.xlane.f32.xlu0 %v1793
  %v1795 = vpop.xlane.xlu0 %1794
  %v1796 = vrcp.pop %v1795
  %v1797 = vmul.f32 %v1792, %v1796
  %v1798 = vadd.f32 %v1797, 0.0
  %vm1799 = vcmp.ge.s32.totalorder %v1780, 4
  %vm1800 = vcmp.lt.s32.totalorder %v1780, 7
  %vm1801 = vmand %vm1799, %vm1800
  %v1802 = vsel %vm1801, %v1774, -inf
  %v1803 = vsel %vm1785, %v1802, -inf
  %1804 = vmax.xlane.f32.xlu0 %v1803
  %v1805 = vpop.xlane.xlu0 %1804
  %v1806 = vsub.f32 %v1802, %v1805
  %v1807 = vmul.f32 %v1806, 1.442695
  %v1808 = vpow.pop %v1807
  %v1809 = vsel %vm1801, %v1808, 0.0
  %v1810 = vsel %vm1785, %v1809, 0.0
  %1811 = vadd.xlane.f32.xlu0 %v1810
  %v1812 = vpop.xlane.xlu0 %1811
  %v1813 = vrcp.pop %v1812
  %v1814 = vmul.f32 %v1809, %v1813
  %v1815 = vadd.f32 %v1798, %v1814
  %1816 = vst [vmem:[%s9] sm:$0x3] %v1815
  // Predicated region
  $region38: #{actor_forward.3} parent=0 // pred_check
    _
  $region39: #{actor_forward.3} parent=0 // pred_check_branch
    %1818 = sbr.rel (0) target = $region41
  $region40: #{actor_forward.3} parent=0 // pred_region
    _
  $region41: #{actor_forward.3} parent=0 // pred_fallthru
    _
  // Predicated region
  $region42: #{actor_forward.3} parent=0 // pred_check
    _
  $region43: #{actor_forward.3} parent=0 // pred_check_branch
    %1820 = sbr.rel (0) target = $region45
  $region44: #{actor_forward.3} parent=0 // pred_region
    _
  $region45: #{actor_forward.3} parent=0 // pred_fallthru
    _

</llo_original>
